<compile_context>
chip_gen: v7x
topology: tpu7x:2x2x1
jax: 0.10.0
libtpu: 0.0.40
codegen_flags: <defaults>
</compile_context>

<pallas_src>
import jax
import jax.numpy as jnp
import numpy as np
from jax.experimental import pallas as pl
from jax.experimental.pallas import tpu as pltpu

EPS = 1e-5  # nn.BatchNorm2d default eps
_VMEM_LIMIT = 32 * 1024 * 1024  # safe scoped-VMEM limit on v5e/v6e/v7x


# ---------------------------------------------------------------------------
# Tile-size helpers
# ---------------------------------------------------------------------------
def _pick_batch_tile(n, bytes_per_image, rows_per_image, target_bytes=2 << 20):
    """Divisor TN of n: flattened row-block sublane aligned (or TN==n), tile
    near `target_bytes`, and >=2 grid steps kept when n>1 (v7x megacore)."""
    ok = [t for t in range(1, n + 1)
          if n % t == 0 and (t == n or (t * rows_per_image) % 8 == 0)]
    if n > 1 and any(t < n for t in ok):
        ok = [t for t in ok if t < n]
    big = [t for t in ok if t * bytes_per_image >= target_bytes]
    return min(big) if big else max(ok)


def _pick_row_tile(total_rows, row_bytes, target_bytes=1 << 20):
    """Divisor TR of total_rows, multiple of 8 (or the full extent)."""
    ok = [t for t in range(1, total_rows + 1)
          if total_rows % t == 0 and (t == total_rows or t % 8 == 0)]
    if total_rows > 1 and any(t < total_rows for t in ok):
        ok = [t for t in ok if t < total_rows]
    big = [t for t in ok if t * row_bytes >= target_bytes]
    return min(big) if big else max(ok)


# ---------------------------------------------------------------------------
# Pass 1: fused ReLU + depthwise conv + pointwise conv + partial BN stats
# ---------------------------------------------------------------------------
def _make_conv_stats_kernel(k, stride, dilation, Ho, Wo):
    def kernel(xp_ref, wdw_ref, wpw_ref, y_ref, stats_ref, xr_ref):
        # xp_ref   : (TN, Hp, Wp, Cin)  zero-padded input tile (pre-ReLU)
        # wdw_ref  : (k*k, Cin)         depthwise taps (tap-major), f32
        # wpw_ref  : (Cin, Cout)        pointwise 1x1 weight (transposed), f32
        # y_ref    : (TN*Ho*Wo, Cout)   conv output tile
        # stats_ref: (1, 2, Cout)       per-tile [sum, sum-of-squares]
        # xr_ref   : (TN, Hp, Wp, Cin)  f32 VMEM scratch (ReLU'd input)
        TN, _, _, Cin = xp_ref.shape

        # Fused ReLU + f32 cast, applied once per tile (not once per tap).
        xr_ref[...] = jnp.maximum(xp_ref[...], 0).astype(jnp.float32)

        # Depthwise conv: k*k strided window loads, per-channel scale, VPU add.
        acc = None
        for i in range(k):
            for j in range(k):
                if stride == 1:
                    hs = pl.ds(i * dilation, Ho)
                    ws = pl.ds(j * dilation, Wo)
                else:  # stride > 1: strided VMEM loads do the subsampling
                    hs = pl.ds(i * dilation, Ho, stride=stride)
                    ws = pl.ds(j * dilation, Wo, stride=stride)
                tap = xr_ref[:, hs, ws, :]               # (TN,Ho,Wo,Cin) f32
                w_tap = wdw_ref[pl.ds(i * k + j, 1), :]  # (1, Cin)
                contrib = tap * w_tap
                acc = contrib if acc is None else acc + contrib

        # Pointwise 1x1 conv: one MXU matmul over the flattened rows.
        x_dw = acc.reshape(TN * Ho * Wo, Cin)            # minor dim unchanged
        y = jnp.dot(x_dw, wpw_ref[...],
                    preferred_element_type=jnp.float32)  # (rows, Cout) f32
        y_ref[...] = y.astype(y_ref.dtype)

        # Single-pass partial statistics for BatchNorm (sum, sum of squares).
        s1 = jnp.sum(y, axis=0, keepdims=True)                  # (1, Cout)
        s2 = jnp.sum(y * y, axis=0, keepdims=True)              # (1, Cout)
        stats_ref[0, :, :] = jnp.concatenate([s1, s2], axis=0)  # (2, Cout)

    return kernel


# ---------------------------------------------------------------------------
# Pass 2: apply BatchNorm affine normalization (lane-dense elementwise pass)
# ---------------------------------------------------------------------------
def _bn_apply_kernel(y_ref, scale_ref, shift_ref, out_ref):
    y = y_ref[...].astype(jnp.float32)
    out_ref[...] = (y * scale_ref[...] + shift_ref[...]).astype(out_ref.dtype)


# ---------------------------------------------------------------------------
# Public wrapper (NCHW in / NCHW out, matching the PyTorch module)
# ---------------------------------------------------------------------------
def sep_conv_forward(x_nchw, w_dw, w_pw, gamma=None, beta=None, *,
                     stride=1, padding=1, dilation=1, eps=EPS):
    """SepConv forward.  x:(N,Cin,H,W)  w_dw:(Cin,1,k,k)  w_pw:(Cout,Cin,1,1)."""
    N, Cin, H, W = x_nchw.shape
    k = w_dw.shape[2]
    Cout = w_pw.shape[0]

    Ho = (H + 2 * padding - dilation * (k - 1) - 1) // stride + 1
    Wo = (W + 2 * padding - dilation * (k - 1) - 1) // stride + 1
    Hp = (Ho - 1) * stride + dilation * (k - 1) + 1   # rows actually read
    Wp = (Wo - 1) * stride + dilation * (k - 1) + 1

    # --- glue: NCHW -> NHWC + halo zero pad (only HBM-side data movement) ---
    # TODO(synk): drop both boundary transposes if the surrounding model
    # produces/consumes NHWC directly.
    x = jnp.transpose(x_nchw, (0, 2, 3, 1))
    xp = jnp.pad(x, ((0, 0),
                     (padding, max(0, Hp - H - padding)),
                     (padding, max(0, Wp - W - padding)),
                     (0, 0)))[:, :Hp, :Wp, :]

    wdw_mat = jnp.transpose(w_dw[:, 0, :, :], (1, 2, 0)) \
                 .reshape(k * k, Cin).astype(jnp.float32)        # (k*k, Cin)
    wpw_mat = w_pw[:, :, 0, 0].T.astype(jnp.float32)             # (Cin, Cout)

    itemsize = jnp.dtype(x.dtype).itemsize
    rows_per_image = Ho * Wo
    TN = _pick_batch_tile(N, Hp * Wp * Cin * itemsize, rows_per_image)
    # TODO(synk): add Ho-row tiling (with halo) for very large single-image
    # inputs; batch-only tiling is sufficient for typical NAS cell shapes.
    n_tiles = N // TN
    tile_rows = TN * rows_per_image
    M = N * rows_per_image

    y, stats = pl.pallas_call(
        _make_conv_stats_kernel(k, stride, dilation, Ho, Wo),
        grid=(n_tiles,),
        in_specs=[
            pl.BlockSpec((TN, Hp, Wp, Cin), lambda b: (b, 0, 0, 0)),
            pl.BlockSpec((k * k, Cin), lambda b: (0, 0)),
            pl.BlockSpec((Cin, Cout), lambda b: (0, 0)),
        ],
        out_specs=(
            pl.BlockSpec((tile_rows, Cout), lambda b: (b, 0)),
            pl.BlockSpec((1, 2, Cout), lambda b: (b, 0, 0)),
        ),
        out_shape=(
            jax.ShapeDtypeStruct((M, Cout), x.dtype),
            jax.ShapeDtypeStruct((n_tiles, 2, Cout), jnp.float32),
        ),
        scratch_shapes=[pltpu.VMEM((TN, Hp, Wp, Cin), jnp.float32)],
        compiler_params=pltpu.CompilerParams(
            dimension_semantics=("parallel",),
            vmem_limit_bytes=_VMEM_LIMIT),
    )(xp, wdw_mat, wpw_mat)

    # --- tiny per-channel reduction of the per-tile partials (f32) ---
    sums = stats[:, 0, :].sum(axis=0)
    sumsqs = stats[:, 1, :].sum(axis=0)
    mean = sums / M
    var = jnp.maximum(sumsqs / M - mean * mean, 0.0)   # biased var (train mode)
    g = jnp.ones((Cout,), jnp.float32) if gamma is None else gamma.astype(jnp.float32)
    b = jnp.zeros((Cout,), jnp.float32) if beta is None else beta.astype(jnp.float32)
    scale = g * jax.lax.rsqrt(var + eps)
    shift = b - mean * scale
    # TODO(synk): running_mean/running_var buffer updates (track_running_stats)
    # are training state, not forward math; batch statistics are used as
    # PyTorch does in train mode.

    # --- pass 2: normalize in place on a lane-dense (N*Ho, Wo*Cout) view ---
    L = Wo * Cout
    R = N * Ho
    y2 = y.reshape(R, L)                                # free (row-major) view
    scale_t = jnp.tile(scale, (Wo,)).reshape(1, L)
    shift_t = jnp.tile(shift, (Wo,)).reshape(1, L)
    TR = _pick_row_tile(R, L * itemsize)

    out2 = pl.pallas_call(
        _bn_apply_kernel,
        grid=(R // TR,),
        in_specs=[
            pl.BlockSpec((TR, L), lambda r: (r, 0)),
            pl.BlockSpec((1, L), lambda r: (0, 0)),
            pl.BlockSpec((1, L), lambda r: (0, 0)),
        ],
        out_specs=pl.BlockSpec((TR, L), lambda r: (r, 0)),
        out_shape=jax.ShapeDtypeStruct((R, L), x.dtype),
        input_output_aliases={0: 0},                     # normalize y in place
        compiler_params=pltpu.CompilerParams(
            dimension_semantics=("parallel",),
            vmem_limit_bytes=_VMEM_LIMIT),
    )(y2, scale_t, shift_t)

    out = out2.reshape(N, Ho, Wo, Cout)
    return jnp.transpose(out, (0, 3, 1, 2))              # back to NCHW


# ---------------------------------------------------------------------------
# Pure-JAX reference (mirrors the PyTorch forward, NCHW) for verification
# ---------------------------------------------------------------------------
def reference_sepconv(x, w_dw, w_pw, gamma, beta, stride, padding, dilation):
    dn = ('NCHW', 'OIHW', 'NCHW')
    xr = jax.nn.relu(x)
    y = jax.lax.conv_general_dilated(
        xr, w_dw, (stride, stride), [(padding, padding), (padding, padding)],
        rhs_dilation=(dilation, dilation), dimension_numbers=dn,
        feature_group_count=x.shape[1])
    y = jax.lax.conv_general_dilated(y, w_pw, (1, 1), 'VALID',
                                     dimension_numbers=dn)
    mean = y.mean(axis=(0, 2, 3), keepdims=True)
    var = ((y - mean) ** 2).mean(axis=(0, 2, 3), keepdims=True)
    yh = (y - mean) / jnp.sqrt(var + EPS)
    return yh * gamma.reshape(1, -1, 1, 1) + beta.reshape(1, -1, 1, 1)


# ---------------------------------------------------------------------------
if __name__ == "__main__":
    N, C_in, C_out, H, W = 2, 4, 8, 16, 16
    k, stride, padding, dilation = 3, 1, 1, 1          # canonical SepConv config

    key = jax.random.PRNGKey(0)
    kx, kdw, kpw, kg, kb = jax.random.split(key, 5)
    x = jax.random.normal(kx, (N, C_in, H, W), jnp.float32)

    bound_dw = 1.0 / np.sqrt(k * k)                    # fan_in = 1*k*k (groups=Cin)
    w_dw = jax.random.uniform(kdw, (C_in, 1, k, k), jnp.float32,
                              minval=-bound_dw, maxval=bound_dw)
    bound_pw = 1.0 / np.sqrt(C_in)
    w_pw = jax.random.uniform(kpw, (C_out, C_in, 1, 1), jnp.float32,
                              minval=-bound_pw, maxval=bound_pw)
    gamma = jax.random.uniform(kg, (C_out,), jnp.float32, minval=0.5, maxval=1.5)
    beta = jax.random.uniform(kb, (C_out,), jnp.float32, minval=-0.5, maxval=0.5)

    fwd = jax.jit(sep_conv_forward,
                  static_argnames=("stride", "padding", "dilation", "eps"))
    out = fwd(x, w_dw, w_pw, gamma, beta,
              stride=stride, padding=padding, dilation=dilation)
    out = jax.block_until_ready(out)

    ref = reference_sepconv(x, w_dw, w_pw, gamma, beta, stride, padding, dilation)
    assert out.shape == (N, C_out, H, W), out.shape
    np.testing.assert_allclose(np.asarray(out), np.asarray(ref),
                               rtol=2e-4, atol=2e-4)
    print("KERNEL_OK")
</pallas_src>

<mosaic_0001>
module attributes {stable_mosaic.version = 11 : i64} {
  func.func @kernel(%arg0: i32, %arg1: memref<1x18x18x4xf32, #tpu.memory_space<vmem>>, %arg2: memref<9x4xf32, #tpu.memory_space<vmem>>, %arg3: memref<4x8xf32, #tpu.memory_space<vmem>>, %arg4: memref<256x8xf32, #tpu.memory_space<vmem>>, %arg5: memref<1x2x8xf32, #tpu.memory_space<vmem>>, %arg6: memref<1x18x18x4xf32, #tpu.memory_space<vmem>>) attributes {dimension_semantics = [#tpu.dimension_semantics<parallel>], iteration_bounds = array<i64: 2>, scalar_prefetch = 0 : i64, scratch_operands = 1 : i64, tpu.core_type = #tpu.core_type<tc>, window_params = [{transform_indices = @transform_0, window_bounds = array<i64: 1, 18, 18, 4>}, {pipeline_mode = #tpu.pipeline_mode<synchronous>, transform_indices = @transform_1, window_bounds = array<i64: 9, 4>}, {pipeline_mode = #tpu.pipeline_mode<synchronous>, transform_indices = @transform_2, window_bounds = array<i64: 4, 8>}, {transform_indices = @transform_3, window_bounds = array<i64: 256, 8>}, {transform_indices = @transform_4, window_bounds = array<i64: 1, 2, 8>}]} {
    %c0 = arith.constant 0 : index
    %c0_0 = arith.constant 0 : index
    %c0_1 = arith.constant 0 : index
    %c0_2 = arith.constant 0 : index
    %0 = vector.load %arg1[%c0, %c0_0, %c0_1, %c0_2] : memref<1x18x18x4xf32, #tpu.memory_space<vmem>>, vector<1x18x18x4xf32>
    %cst = arith.constant 0.000000e+00 : f32
    %1 = vector.broadcast %cst : f32 to vector<1x18x18x4xf32>
    %2 = arith.maximumf %0, %1 : vector<1x18x18x4xf32>
    %c0_3 = arith.constant 0 : index
    %c0_4 = arith.constant 0 : index
    %c0_5 = arith.constant 0 : index
    %c0_6 = arith.constant 0 : index
    %3 = vector.load %arg6[%c0_3, %c0_4, %c0_5, %c0_6] : memref<1x18x18x4xf32, #tpu.memory_space<vmem>>, vector<1x18x18x4xf32>
    tpu.vector_store %arg6[%c0_3, %c0_4, %c0_5, %c0_6], %2 {strides = array<i32>} : memref<1x18x18x4xf32, #tpu.memory_space<vmem>>, vector<1x18x18x4xf32>,
    %c0_7 = arith.constant 0 : index
    %c0_8 = arith.constant 0 : index
    %c0_9 = arith.constant 0 : index
    %c0_10 = arith.constant 0 : index
    %4 = vector.load %arg6[%c0_7, %c0_8, %c0_9, %c0_10] : memref<1x18x18x4xf32, #tpu.memory_space<vmem>>, vector<1x16x16x4xf32>
    %c0_11 = arith.constant 0 : index
    %c0_12 = arith.constant 0 : index
    %5 = vector.load %arg2[%c0_11, %c0_12] : memref<9x4xf32, #tpu.memory_space<vmem>>, vector<1x4xf32>
    %6 = vector.shape_cast %5 : vector<1x4xf32> to vector<1x1x1x4xf32>
    %7 = vector.broadcast %6 : vector<1x1x1x4xf32> to vector<1x16x16x4xf32>
    %8 = arith.mulf %4, %7 : vector<1x16x16x4xf32>
    %c0_13 = arith.constant 0 : index
    %c0_14 = arith.constant 0 : index
    %c1 = arith.constant 1 : index
    %c0_15 = arith.constant 0 : index
    %9 = vector.load %arg6[%c0_13, %c0_14, %c1, %c0_15] : memref<1x18x18x4xf32, #tpu.memory_space<vmem>>, vector<1x16x16x4xf32>
    %c1_16 = arith.constant 1 : index
    %c0_17 = arith.constant 0 : index
    %10 = vector.load %arg2[%c1_16, %c0_17] : memref<9x4xf32, #tpu.memory_space<vmem>>, vector<1x4xf32>
    %11 = vector.shape_cast %10 : vector<1x4xf32> to vector<1x1x1x4xf32>
    %12 = vector.broadcast %11 : vector<1x1x1x4xf32> to vector<1x16x16x4xf32>
    %13 = arith.mulf %9, %12 : vector<1x16x16x4xf32>
    %14 = arith.addf %8, %13 : vector<1x16x16x4xf32>
    %c0_18 = arith.constant 0 : index
    %c0_19 = arith.constant 0 : index
    %c2 = arith.constant 2 : index
    %c0_20 = arith.constant 0 : index
    %15 = vector.load %arg6[%c0_18, %c0_19, %c2, %c0_20] : memref<1x18x18x4xf32, #tpu.memory_space<vmem>>, vector<1x16x16x4xf32>
    %c2_21 = arith.constant 2 : index
    %c0_22 = arith.constant 0 : index
    %16 = vector.load %arg2[%c2_21, %c0_22] : memref<9x4xf32, #tpu.memory_space<vmem>>, vector<1x4xf32>
    %17 = vector.shape_cast %16 : vector<1x4xf32> to vector<1x1x1x4xf32>
    %18 = vector.broadcast %17 : vector<1x1x1x4xf32> to vector<1x16x16x4xf32>
    %19 = arith.mulf %15, %18 : vector<1x16x16x4xf32>
    %20 = arith.addf %14, %19 : vector<1x16x16x4xf32>
    %c0_23 = arith.constant 0 : index
    %c1_24 = arith.constant 1 : index
    %c0_25 = arith.constant 0 : index
    %c0_26 = arith.constant 0 : index
    %21 = vector.load %arg6[%c0_23, %c1_24, %c0_25, %c0_26] : memref<1x18x18x4xf32, #tpu.memory_space<vmem>>, vector<1x16x16x4xf32>
    %c3 = arith.constant 3 : index
    %c0_27 = arith.constant 0 : index
    %22 = vector.load %arg2[%c3, %c0_27] : memref<9x4xf32, #tpu.memory_space<vmem>>, vector<1x4xf32>
    %23 = vector.shape_cast %22 : vector<1x4xf32> to vector<1x1x1x4xf32>
    %24 = vector.broadcast %23 : vector<1x1x1x4xf32> to vector<1x16x16x4xf32>
    %25 = arith.mulf %21, %24 : vector<1x16x16x4xf32>
    %26 = arith.addf %20, %25 : vector<1x16x16x4xf32>
    %c0_28 = arith.constant 0 : index
    %c1_29 = arith.constant 1 : index
    %c1_30 = arith.constant 1 : index
    %c0_31 = arith.constant 0 : index
    %27 = vector.load %arg6[%c0_28, %c1_29, %c1_30, %c0_31] : memref<1x18x18x4xf32, #tpu.memory_space<vmem>>, vector<1x16x16x4xf32>
    %c4 = arith.constant 4 : index
    %c0_32 = arith.constant 0 : index
    %28 = vector.load %arg2[%c4, %c0_32] : memref<9x4xf32, #tpu.memory_space<vmem>>, vector<1x4xf32>
    %29 = vector.shape_cast %28 : vector<1x4xf32> to vector<1x1x1x4xf32>
    %30 = vector.broadcast %29 : vector<1x1x1x4xf32> to vector<1x16x16x4xf32>
    %31 = arith.mulf %27, %30 : vector<1x16x16x4xf32>
    %32 = arith.addf %26, %31 : vector<1x16x16x4xf32>
    %c0_33 = arith.constant 0 : index
    %c1_34 = arith.constant 1 : index
    %c2_35 = arith.constant 2 : index
    %c0_36 = arith.constant 0 : index
    %33 = vector.load %arg6[%c0_33, %c1_34, %c2_35, %c0_36] : memref<1x18x18x4xf32, #tpu.memory_space<vmem>>, vector<1x16x16x4xf32>
    %c5 = arith.constant 5 : index
    %c0_37 = arith.constant 0 : index
    %34 = vector.load %arg2[%c5, %c0_37] : memref<9x4xf32, #tpu.memory_space<vmem>>, vector<1x4xf32>
    %35 = vector.shape_cast %34 : vector<1x4xf32> to vector<1x1x1x4xf32>
    %36 = vector.broadcast %35 : vector<1x1x1x4xf32> to vector<1x16x16x4xf32>
    %37 = arith.mulf %33, %36 : vector<1x16x16x4xf32>
    %38 = arith.addf %32, %37 : vector<1x16x16x4xf32>
    %c0_38 = arith.constant 0 : index
    %c2_39 = arith.constant 2 : index
    %c0_40 = arith.constant 0 : index
    %c0_41 = arith.constant 0 : index
    %39 = vector.load %arg6[%c0_38, %c2_39, %c0_40, %c0_41] : memref<1x18x18x4xf32, #tpu.memory_space<vmem>>, vector<1x16x16x4xf32>
    %c6 = arith.constant 6 : index
    %c0_42 = arith.constant 0 : index
    %40 = vector.load %arg2[%c6, %c0_42] : memref<9x4xf32, #tpu.memory_space<vmem>>, vector<1x4xf32>
    %41 = vector.shape_cast %40 : vector<1x4xf32> to vector<1x1x1x4xf32>
    %42 = vector.broadcast %41 : vector<1x1x1x4xf32> to vector<1x16x16x4xf32>
    %43 = arith.mulf %39, %42 : vector<1x16x16x4xf32>
    %44 = arith.addf %38, %43 : vector<1x16x16x4xf32>
    %c0_43 = arith.constant 0 : index
    %c2_44 = arith.constant 2 : index
    %c1_45 = arith.constant 1 : index
    %c0_46 = arith.constant 0 : index
    %45 = vector.load %arg6[%c0_43, %c2_44, %c1_45, %c0_46] : memref<1x18x18x4xf32, #tpu.memory_space<vmem>>, vector<1x16x16x4xf32>
    %c7 = arith.constant 7 : index
    %c0_47 = arith.constant 0 : index
    %46 = vector.load %arg2[%c7, %c0_47] : memref<9x4xf32, #tpu.memory_space<vmem>>, vector<1x4xf32>
    %47 = vector.shape_cast %46 : vector<1x4xf32> to vector<1x1x1x4xf32>
    %48 = vector.broadcast %47 : vector<1x1x1x4xf32> to vector<1x16x16x4xf32>
    %49 = arith.mulf %45, %48 : vector<1x16x16x4xf32>
    %50 = arith.addf %44, %49 : vector<1x16x16x4xf32>
    %c0_48 = arith.constant 0 : index
    %c2_49 = arith.constant 2 : index
    %c2_50 = arith.constant 2 : index
    %c0_51 = arith.constant 0 : index
    %51 = vector.load %arg6[%c0_48, %c2_49, %c2_50, %c0_51] : memref<1x18x18x4xf32, #tpu.memory_space<vmem>>, vector<1x16x16x4xf32>
    %c8 = arith.constant 8 : index
    %c0_52 = arith.constant 0 : index
    %52 = vector.load %arg2[%c8, %c0_52] : memref<9x4xf32, #tpu.memory_space<vmem>>, vector<1x4xf32>
    %53 = vector.shape_cast %52 : vector<1x4xf32> to vector<1x1x1x4xf32>
    %54 = vector.broadcast %53 : vector<1x1x1x4xf32> to vector<1x16x16x4xf32>
    %55 = arith.mulf %51, %54 : vector<1x16x16x4xf32>
    %56 = arith.addf %50, %55 : vector<1x16x16x4xf32>
    %57 = vector.shape_cast %56 : vector<1x16x16x4xf32> to vector<256x4xf32>
    %c0_53 = arith.constant 0 : index
    %c0_54 = arith.constant 0 : index
    %58 = vector.load %arg3[%c0_53, %c0_54] : memref<4x8xf32, #tpu.memory_space<vmem>>, vector<4x8xf32>
    %cst_55 = arith.constant dense<0.000000e+00> : vector<256x8xf32>
    %59 = tpu.matmul %57, %58, %cst_55 {dimension_numbers = #tpu.dot_dimension_numbers<[1], [0], [0], [1], [0, 0, 1, 1], [], []>} : vector<256x4xf32>, vector<4x8xf32>, vector<256x8xf32> -> vector<256x8xf32>
    %c0_56 = arith.constant 0 : index
    %c0_57 = arith.constant 0 : index
    %60 = vector.load %arg4[%c0_56, %c0_57] : memref<256x8xf32, #tpu.memory_space<vmem>>, vector<256x8xf32>
    tpu.vector_store %arg4[%c0_56, %c0_57], %59 {strides = array<i32>} : memref<256x8xf32, #tpu.memory_space<vmem>>, vector<256x8xf32>,
    %cst_58 = arith.constant dense<0.000000e+00> : vector<8xf32>
    %61 = vector.multi_reduction <add>, %59, %cst_58 [0] : vector<256x8xf32> to vector<8xf32>
    %62 = vector.shape_cast %61 : vector<8xf32> to vector<1x8xf32>
    %63 = arith.mulf %59, %59 : vector<256x8xf32>
    %cst_59 = arith.constant dense<0.000000e+00> : vector<8xf32>
    %64 = vector.multi_reduction <add>, %63, %cst_59 [0] : vector<256x8xf32> to vector<8xf32>
    %65 = vector.shape_cast %64 : vector<8xf32> to vector<1x8xf32>
    %66 = tpu.concatenate %62, %65 in 0 : vector<1x8xf32>, vector<1x8xf32> -> vector<2x8xf32>
    %c0_60 = arith.constant 0 : index
    %c0_61 = arith.constant 0 : index
    %c0_62 = arith.constant 0 : index
    %67 = vector.load %arg5[%c0_60, %c0_61, %c0_62] : memref<1x2x8xf32, #tpu.memory_space<vmem>>, vector<1x2x8xf32>
    %68 = vector.shape_cast %67 : vector<1x2x8xf32> to vector<2x8xf32>
    %69 = vector.shape_cast %66 : vector<2x8xf32> to vector<1x2x8xf32>
    tpu.vector_store %arg5[%c0_60, %c0_61, %c0_62], %69 {strides = array<i32>} : memref<1x2x8xf32, #tpu.memory_space<vmem>>, vector<1x2x8xf32>,
    return
  }
  func.func @transform_0(%arg0: i32) -> (i32, i32, i32, i32) {
    %c0_i32 = arith.constant 0 : i32
    %c0_i32_0 = arith.constant 0 : i32
    %c0_i32_1 = arith.constant 0 : i32
    %c0_i32_2 = arith.constant 0 : i32
    return %arg0, %c0_i32, %c0_i32_0, %c0_i32_1 : i32, i32, i32, i32
  }
  func.func @transform_1(%arg0: i32) -> (i32, i32) {
    %c0_i32 = arith.constant 0 : i32
    %c0_i32_0 = arith.constant 0 : i32
    %c0_i32_1 = arith.constant 0 : i32
    return %c0_i32, %c0_i32_0 : i32, i32
  }
  func.func @transform_2(%arg0: i32) -> (i32, i32) {
    %c0_i32 = arith.constant 0 : i32
    %c0_i32_0 = arith.constant 0 : i32
    %c0_i32_1 = arith.constant 0 : i32
    return %c0_i32, %c0_i32_0 : i32, i32
  }
  func.func @transform_3(%arg0: i32) -> (i32, i32) {
    %c0_i32 = arith.constant 0 : i32
    %c0_i32_0 = arith.constant 0 : i32
    return %arg0, %c0_i32 : i32, i32
  }
  func.func @transform_4(%arg0: i32) -> (i32, i32, i32) {
    %c0_i32 = arith.constant 0 : i32
    %c0_i32_0 = arith.constant 0 : i32
    %c0_i32_1 = arith.constant 0 : i32
    return %arg0, %c0_i32, %c0_i32_0 : i32, i32, i32
  }
}

module attributes {stable_mosaic.version = 11 : i64} {
  func.func @_bn_apply_kernel(%arg0: i32, %arg1: memref<16x128xf32, #tpu.memory_space<vmem>>, %arg2: memref<1x128xf32, #tpu.memory_space<vmem>>, %arg3: memref<1x128xf32, #tpu.memory_space<vmem>>, %arg4: memref<16x128xf32, #tpu.memory_space<vmem>>) attributes {dimension_semantics = [#tpu.dimension_semantics<parallel>], iteration_bounds = array<i64: 2>, scalar_prefetch = 0 : i64, scratch_operands = 0 : i64, tpu.core_type = #tpu.core_type<tc>, window_params = [{transform_indices = @transform_0, window_bounds = array<i64: 16, 128>}, {pipeline_mode = #tpu.pipeline_mode<synchronous>, transform_indices = @transform_1, window_bounds = array<i64: 1, 128>}, {pipeline_mode = #tpu.pipeline_mode<synchronous>, transform_indices = @transform_2, window_bounds = array<i64: 1, 128>}, {transform_indices = @transform_3, window_bounds = array<i64: 16, 128>}]} {
    %c0 = arith.constant 0 : index
    %c0_0 = arith.constant 0 : index
    %0 = vector.load %arg1[%c0, %c0_0] : memref<16x128xf32, #tpu.memory_space<vmem>>, vector<16x128xf32>
    %c0_1 = arith.constant 0 : index
    %c0_2 = arith.constant 0 : index
    %1 = vector.load %arg2[%c0_1, %c0_2] : memref<1x128xf32, #tpu.memory_space<vmem>>, vector<1x128xf32>
    %2 = vector.broadcast %1 : vector<1x128xf32> to vector<16x128xf32>
    %3 = arith.mulf %0, %2 : vector<16x128xf32>
    %c0_3 = arith.constant 0 : index
    %c0_4 = arith.constant 0 : index
    %4 = vector.load %arg3[%c0_3, %c0_4] : memref<1x128xf32, #tpu.memory_space<vmem>>, vector<1x128xf32>
    %5 = vector.broadcast %4 : vector<1x128xf32> to vector<16x128xf32>
    %6 = arith.addf %3, %5 : vector<16x128xf32>
    %c0_5 = arith.constant 0 : index
    %c0_6 = arith.constant 0 : index
    %7 = vector.load %arg4[%c0_5, %c0_6] : memref<16x128xf32, #tpu.memory_space<vmem>>, vector<16x128xf32>
    tpu.vector_store %arg4[%c0_5, %c0_6], %6 {strides = array<i32>} : memref<16x128xf32, #tpu.memory_space<vmem>>, vector<16x128xf32>,
    return
  }
  func.func @transform_0(%arg0: i32) -> (i32, i32) {
    %c0_i32 = arith.constant 0 : i32
    %c0_i32_0 = arith.constant 0 : i32
    return %arg0, %c0_i32 : i32, i32
  }
  func.func @transform_1(%arg0: i32) -> (i32, i32) {
    %c0_i32 = arith.constant 0 : i32
    %c0_i32_0 = arith.constant 0 : i32
    %c0_i32_1 = arith.constant 0 : i32
    return %c0_i32, %c0_i32_0 : i32, i32
  }
  func.func @transform_2(%arg0: i32) -> (i32, i32) {
    %c0_i32 = arith.constant 0 : i32
    %c0_i32_0 = arith.constant 0 : i32
    %c0_i32_1 = arith.constant 0 : i32
    return %c0_i32, %c0_i32_0 : i32, i32
  }
  func.func @transform_3(%arg0: i32) -> (i32, i32) {
    %c0_i32 = arith.constant 0 : i32
    %c0_i32_0 = arith.constant 0 : i32
    return %arg0, %c0_i32 : i32, i32
  }
}

</mosaic_0001>

<llo_original>
// kernel: tile.18
$region0: #{tile.18}
  #allocation0 [shape = 's32[1]{0}', space=sflag, size = 0x4, scoped, tag = 'scoped memory for tile.18']
  %s0 = inlined_call_operand.vmem [shape: f32[8], index: 0, kind: input, shape index: {}]
  %s1 = inlined_call_operand.vmem [shape: f32[16,8], index: 1, kind: output, shape index: {}]
  // Predicated region
  $region2: #{tile.18} parent=0 // pred_check
    _
  $region3: #{tile.18} parent=0 // pred_check_branch
    %3 = sbr.rel (0) target = $region5
  $region4: #{tile.18} parent=0 // pred_region
    _
  $region5: #{tile.18} parent=0 // pred_fallthru
    _
  %v4 = vld [vmem:[%s0] ss:$0 sm:$0xff]
  %5 = vst [vmem:[%s1] sm:$0xff] %v4
  %s6 = scalar_lea.vmem %s1, 8
  %7 = vst [vmem:[%s6] sm:$0xff] %v4

// kernel: tile.19
$region0: #{tile.19}
  %s0 = inlined_call_operand.vmem [shape: f32[16,8], index: 0, kind: input, shape index: {}]
  %s1 = inlined_call_operand.vmem [shape: f32[1,128], index: 1, kind: output, shape index: {}]
  $region1: #{tile.19} parent=0
    #allocation0 [shape = 'u8[4096]{0}', space=vmem, size = 0x1000, scoped, tag = 'scoped mem for output reshape']
    %v2 = vld [vmem:[%s0] sm:$0x1]
    %vm3 = vcmask 64512
    %4 = vst.msk [vmem:[#allocation0] sm:$0x1] %vm3, %v2
    %s5 = scalar_lea.vmem %s0, 15
    %v6 = vld [vmem:[%s5] sm:$0x1]
    %7 = vrot.lane.b32.xlu0 %v6, 120
    %v8 = vpop.permute.xlu0 %7
    %vm9 = vcmask 1048512
    %10 = vst.msk [vmem:[#allocation0] sm:$0x1] %vm9, %v8
    %s11 = scalar_lea.vmem %s0, 14
    %v12 = vld [vmem:[%s11] sm:$0x1]
    %13 = vrot.lane.b32.xlu0 %v12, 112
    %v14 = vpop.permute.xlu0 %13
    %vm15 = vcmask 982912
    %16 = vst.msk [vmem:[#allocation0] sm:$0x1] %vm15, %v14
    %s17 = scalar_lea.vmem %s0, 13
    %v18 = vld [vmem:[%s17] sm:$0x1]
    %19 = vrot.lane.b32.xlu0 %v18, 104
    %v20 = vpop.permute.xlu0 %19
    %vm21 = vcmask 917312
    %22 = vst.msk [vmem:[#allocation0] sm:$0x1] %vm21, %v20
    %s23 = scalar_lea.vmem %s0, 12
    %v24 = vld [vmem:[%s23] sm:$0x1]
    %25 = vrot.lane.b32.xlu0 %v24, 96
    %v26 = vpop.permute.xlu0 %25
    %vm27 = vcmask 851712
    %28 = vst.msk [vmem:[#allocation0] sm:$0x1] %vm27, %v26
    %s29 = scalar_lea.vmem %s0, 11
    %v30 = vld [vmem:[%s29] sm:$0x1]
    %31 = vrot.lane.b32.xlu0 %v30, 88
    %v32 = vpop.permute.xlu0 %31
    %vm33 = vcmask 786112
    %34 = vst.msk [vmem:[#allocation0] sm:$0x1] %vm33, %v32
    %s35 = scalar_lea.vmem %s0, 10
    %v36 = vld [vmem:[%s35] sm:$0x1]
    %37 = vrot.lane.b32.xlu0 %v36, 80
    %v38 = vpop.permute.xlu0 %37
    %vm39 = vcmask 720512
    %40 = vst.msk [vmem:[#allocation0] sm:$0x1] %vm39, %v38
    %s41 = scalar_lea.vmem %s0, 9
    %v42 = vld [vmem:[%s41] sm:$0x1]
    %43 = vrot.lane.b32.xlu0 %v42, 72
    %v44 = vpop.permute.xlu0 %43
    %vm45 = vcmask 654912
    %46 = vst.msk [vmem:[#allocation0] sm:$0x1] %vm45, %v44
    %s47 = scalar_lea.vmem %s0, 8
    %v48 = vld [vmem:[%s47] sm:$0x1]
    %49 = vrot.lane.b32.xlu0 %v48, 64
    %v50 = vpop.permute.xlu0 %49
    %vm51 = vcmask 589312
    %52 = vst.msk [vmem:[#allocation0] sm:$0x1] %vm51, %v50
    %s53 = scalar_lea.vmem %s0, 7
    %v54 = vld [vmem:[%s53] sm:$0x1]
    %55 = vrot.lane.b32.xlu0 %v54, 56
    %v56 = vpop.permute.xlu0 %55
    %vm57 = vcmask 523712
    %58 = vst.msk [vmem:[#allocation0] sm:$0x1] %vm57, %v56
    %s59 = scalar_lea.vmem %s0, 6
    %v60 = vld [vmem:[%s59] sm:$0x1]
    %61 = vrot.lane.b32.xlu0 %v60, 48
    %v62 = vpop.permute.xlu0 %61
    %vm63 = vcmask 458112
    %64 = vst.msk [vmem:[#allocation0] sm:$0x1] %vm63, %v62
    %s65 = scalar_lea.vmem %s0, 5
    %v66 = vld [vmem:[%s65] sm:$0x1]
    %67 = vrot.lane.b32.xlu0 %v66, 40
    %v68 = vpop.permute.xlu0 %67
    %vm69 = vcmask 392512
    %70 = vst.msk [vmem:[#allocation0] sm:$0x1] %vm69, %v68
    %s71 = scalar_lea.vmem %s0, 4
    %v72 = vld [vmem:[%s71] sm:$0x1]
    %73 = vrot.lane.b32.xlu0 %v72, 32
    %v74 = vpop.permute.xlu0 %73
    %vm75 = vcmask 326912
    %76 = vst.msk [vmem:[#allocation0] sm:$0x1] %vm75, %v74
    %s77 = scalar_lea.vmem %s0, 3
    %v78 = vld [vmem:[%s77] sm:$0x1]
    %79 = vrot.lane.b32.xlu0 %v78, 24
    %v80 = vpop.permute.xlu0 %79
    %vm81 = vcmask 261312
    %82 = vst.msk [vmem:[#allocation0] sm:$0x1] %vm81, %v80
    %s83 = scalar_lea.vmem %s0, 2
    %v84 = vld [vmem:[%s83] sm:$0x1]
    %85 = vrot.lane.b32.xlu0 %v84, 16
    %v86 = vpop.permute.xlu0 %85
    %vm87 = vcmask 195712
    %88 = vst.msk [vmem:[#allocation0] sm:$0x1] %vm87, %v86
    %s89 = scalar_lea.vmem %s0, 1
    %v90 = vld [vmem:[%s89] sm:$0x1]
    %91 = vrot.lane.b32.xlu0 %v90, 8
    %v92 = vpop.permute.xlu0 %91
    %vm93 = vcmask 130112
    %94 = vst.msk [vmem:[#allocation0] sm:$0x1] %vm93, %v92
    %s96 = sshllo.u32 0, 1
    %v98 = vld [vmem:[#allocation0] sm:%s96]
    %s99 = sshllo.u32 0, 1
    %100 = vst [vmem:[%s1] sm:%s99] %v98

// kernel: sep_conv_forward.3
$region0: #{sep_conv_forward.3}
  #allocation0 [shape = 'u32[]', space=smem, size = 0x4, offset = 0x4, fixed_abs, tag = 'smem constant byte address 0x4 - core index']
  #allocation1 [shape = 'u32[144,128]{1,0:T(1,128)}', space=vmem, size = 0x12000, scoped, tag = 'internal scratch']
  %s0 = inlined_call_operand.vmem [shape: f32[32,128], index: 0, kind: input, shape index: {}, may-alias: {0,3}]
  %s1 = inlined_call_operand.vmem [shape: f32[1,128], index: 1, kind: input, shape index: {}]
  %s2 = inlined_call_operand.vmem [shape: f32[1,128], index: 2, kind: input, shape index: {}]
  %s3 = inlined_call_operand.vmem [shape: f32[32,128], index: 3, kind: output, shape index: {}, may-alias: {0,3}]
  %s4 = sld [smem:[#allocation0]]
  $region45: #{sep_conv_forward.3} parent=0
    _
  %s6 = ssub.s32 1, %s4
  %s7 = scalar_select 0, %s6, %s4
  loop: start=0, step=1, limit=4
  $region2: #{sep_conv_forward.3} parent=0 // loop_pre_header
    _
  $region3: #{sep_conv_forward.3} parent=0 // loop_header
    %s9 = sphi 0, %s13
    %p10 = scmp.ge.s32.totalorder %s9, 4
    %s19 = sphi 0, %s21
    %s22 = sphi 0, %s19
    %s23 = sphi 0, %s22
    %s39 = sphi 0, %s23
    %s43 = sphi 0, %s43
    %s45 = sphi 0, %s43
    %s46 = sphi 0, %s45
    %s60 = sphi 0, %s46
    %s64 = sphi 0, %s64
    %s66 = sphi 0, %s64
    %s67 = sphi 0, %s66
    %s81 = sphi 0, %s67
    %s87 = sphi 0, %s89
    %s90 = sphi 0, %s87
    %s91 = sphi 0, %s90
    %s107 = sphi 0, %s91
  $region4: #{sep_conv_forward.3} parent=0 // loop_header_branch
    %12 = sbr.rel (%p10) target = $region8
  $region5: #{sep_conv_forward.3} parent=0 // loop_body
    %s14 = ssub.s32 %s9, 1
    %s15 = ssub.s32 %s9, 2
    %s16 = sadd.s32 %s9, 1
    %s17 = ssub.s32 %s9, %s16
    %p18 = scmp.eq.s32.totalorder %s17, 0
    %s20 = sadd.s32 %s19, 1
    %s21 = scalar_select %p18, %s19, %s20
    %p24 = pneg %p18
    %p25 = scmp.eq.s32.totalorder %s9, 1
    %p26 = por %p24, %p25
    %p27 = scmp.ne.s32.totalorder %s19, %s22
    %p28 = scmp.eq.s32.totalorder %s9, 0
    %p29 = por %p27, %p28
    %p30 = scmp.ne.s32.totalorder %s19, %s22
    %p31 = scmp.eq.s32.totalorder %s14, 1
    %p32 = por %p30, %p31
    %p33 = scmp.ne.s32.totalorder %s22, %s23
    %p34 = scmp.eq.s32.totalorder %s14, 0
    %p35 = por %p33, %p34
    %p36 = scmp.ne.s32.totalorder %s22, %s23
    %p37 = scmp.eq.s32.totalorder %s15, 1
    %p38 = por %p36, %p37
    %p40 = scmp.ne.s32.totalorder %s23, %s39
    %p41 = scmp.eq.s32.totalorder %s15, 0
    %p42 = por %p40, %p41
    %s44 = sadd.s32 %s43, 1
    %p47 = scmp.eq.s32.totalorder %s9, 1
    %p48 = scmp.ne.s32.totalorder %s43, %s45
    %p49 = scmp.eq.s32.totalorder %s9, 0
    %p50 = por %p48, %p49
    %p51 = scmp.ne.s32.totalorder %s43, %s45
    %p52 = scmp.eq.s32.totalorder %s14, 1
    %p53 = por %p51, %p52
    %p54 = scmp.ne.s32.totalorder %s45, %s46
    %p55 = scmp.eq.s32.totalorder %s14, 0
    %p56 = por %p54, %p55
    %p57 = scmp.ne.s32.totalorder %s45, %s46
    %p58 = scmp.eq.s32.totalorder %s15, 1
    %p59 = por %p57, %p58
    %p61 = scmp.ne.s32.totalorder %s46, %s60
    %p62 = scmp.eq.s32.totalorder %s15, 0
    %p63 = por %p61, %p62
    %s65 = sadd.s32 %s64, 1
    %p68 = scmp.eq.s32.totalorder %s9, 1
    %p69 = scmp.ne.s32.totalorder %s64, %s66
    %p70 = scmp.eq.s32.totalorder %s9, 0
    %p71 = por %p69, %p70
    %p72 = scmp.ne.s32.totalorder %s64, %s66
    %p73 = scmp.eq.s32.totalorder %s14, 1
    %p74 = por %p72, %p73
    %p75 = scmp.ne.s32.totalorder %s66, %s67
    %p76 = scmp.eq.s32.totalorder %s14, 0
    %p77 = por %p75, %p76
    %p78 = scmp.ne.s32.totalorder %s66, %s67
    %p79 = scmp.eq.s32.totalorder %s15, 1
    %p80 = por %p78, %p79
    %p82 = scmp.ne.s32.totalorder %s67, %s81
    %p83 = scmp.eq.s32.totalorder %s15, 0
    %p84 = por %p82, %p83
    %s85 = ssub.s32 %s9, %s16
    %p86 = scmp.eq.s32.totalorder %s85, 0
    %s88 = sadd.s32 %s87, 1
    %s89 = scalar_select %p86, %s87, %s88
    %p92 = pneg %p86
    %p93 = scmp.eq.s32.totalorder %s9, 1
    %p94 = por %p92, %p93
    %p95 = scmp.ne.s32.totalorder %s87, %s90
    %p96 = scmp.eq.s32.totalorder %s9, 0
    %p97 = por %p95, %p96
    %p98 = scmp.ne.s32.totalorder %s87, %s90
    %p99 = scmp.eq.s32.totalorder %s14, 1
    %p100 = por %p98, %p99
    %p101 = scmp.ne.s32.totalorder %s90, %s91
    %p102 = scmp.eq.s32.totalorder %s14, 0
    %p103 = por %p101, %p102
    %p104 = scmp.ne.s32.totalorder %s90, %s91
    %p105 = scmp.eq.s32.totalorder %s15, 1
    %p106 = por %p104, %p105
    %p108 = scmp.ne.s32.totalorder %s91, %s107
    %p109 = scmp.eq.s32.totalorder %s15, 0
    %p110 = por %p108, %p109
    %p111 = scmp.le.s32.totalorder 1, %s9
    %p112 = scmp.lt.s32.totalorder %s9, 3
    %p113 = pnand %p111, %p112
    %p114 = pneg %p113
    // Predicated region
    $region9: #{sep_conv_forward.3} parent=5 // pred_check
      _
    $region10: #{sep_conv_forward.3} parent=5 // pred_check_branch
      %116 = sbr.rel (%p113) target = $region12
    $region11: #{sep_conv_forward.3} parent=5 // pred_region
      %s117 = ssub.s32 %s9, 1
      // Predicated region
      $region13: #{sep_conv_forward.3} parent=11 // pred_check
        %p118 = pneg %p56
      $region14: #{sep_conv_forward.3} parent=11 // pred_check_branch
        %120 = sbr.rel (%p118) target = $region16
      $region15: #{sep_conv_forward.3} parent=11 // pred_region
        _
      $region16: #{sep_conv_forward.3} parent=11 // pred_fallthru
        _
      // Predicated region
      $region17: #{sep_conv_forward.3} parent=11 // pred_check
        %p121 = pneg %p77
      $region18: #{sep_conv_forward.3} parent=11 // pred_check_branch
        %123 = sbr.rel (%p121) target = $region20
      $region19: #{sep_conv_forward.3} parent=11 // pred_region
        _
      $region20: #{sep_conv_forward.3} parent=11 // pred_fallthru
        _
    $region12: #{sep_conv_forward.3} parent=5 // pred_fallthru
      _
    %p124 = scmp.lt.s32.totalorder %s9, 2
    // Predicated region
    $region21: #{sep_conv_forward.3} parent=5 // pred_check
      %p125 = pneg %p124
    $region22: #{sep_conv_forward.3} parent=5 // pred_check_branch
      %127 = sbr.rel (%p125) target = $region24
    $region23: #{sep_conv_forward.3} parent=5 // pred_region
      // Predicated region
      $region25: #{sep_conv_forward.3} parent=23 // pred_check
        %p128 = pneg %p29
      $region26: #{sep_conv_forward.3} parent=23 // pred_check_branch
        %130 = sbr.rel (%p128) target = $region28
      $region27: #{sep_conv_forward.3} parent=23 // pred_region
        %s131 = smul.u32 2, %s9
        %p132 = scmp.lt.s32.totalorder %s131, 3
        %s133 = scalar_select %p132, %s131, 3
        %s134 = smul.addr %s133, 8
        %s135 = scalar_lea.vmem %s0, %s134
        %s136 = smul.u32 2, %s9
      $region28: #{sep_conv_forward.3} parent=23 // pred_fallthru
        _
    $region24: #{sep_conv_forward.3} parent=5 // pred_fallthru
      _
    %p137 = scmp.le.s32.totalorder 1, %s9
    %p138 = scmp.lt.s32.totalorder %s9, 3
    %p139 = pnand %p137, %p138
    %p140 = pneg %p139
    // Predicated region
    $region29: #{sep_conv_forward.3} parent=5 // pred_check
      _
    $region30: #{sep_conv_forward.3} parent=5 // pred_check_branch
      %142 = sbr.rel (%p139) target = $region32
    $region31: #{sep_conv_forward.3} parent=5 // pred_region
      %s143 = ssub.s32 %s9, 1
      %s144 = smul.u32 2, %s14
      %p145 = scmp.lt.s32.totalorder %s144, 3
      %s146 = scalar_select %p145, %s144, 3
      %s147 = smul.addr %s146, 8
      %s148 = scalar_lea.vmem %s0, %s147
      %p149 = pneg %p35
      %p150 = pneg %p32
      %p151 = pneg %p56
      %p152 = pneg %p53
      %p153 = pneg %p77
      %p154 = pneg %p74
      %p155 = pneg %p103
      %p156 = pneg %p100
      %s157 = smul.u32 2, %s14
      %p158 = scmp.lt.s32.totalorder %s157, 3
      %s159 = scalar_select %p158, %s157, 3
      %s160 = smul.addr %s159, 8
      %s161 = scalar_lea.vmem %s3, %s160
      %s162 = smul.u32 2, %s14
      %p163 = scmp.lt.s32.totalorder %s162, 3
      %s164 = scalar_select %p163, %s162, 3
      %s165 = smul.addr %s164, 8
      %s166 = scalar_lea.vmem %s0, %s165
      %s167 = smul.u32 2, %s14
      %s168 = smul.u32 2, %s14
      %p169 = scmp.lt.s32.totalorder %s168, 3
      %s170 = scalar_select %p169, %s168, 3
      %s171 = smul.addr %s170, 8
      %s172 = scalar_lea.vmem %s3, %s171
      %s173 = smul.u32 2, %s14
      %v174 = vld [vmem:[%s166] sm:$0xff]
      %v175 = vld [vmem:[%s166 + $0x8] sm:$0xff]
      %v176 = vld [vmem:[%s1] sm:$0x1]
      %v178 = vlaneseq
      %v179 = vshrl.u32 %v178, 7
      %v180 = vsub.s32 0, %v179
      %v181 = vrot.slane %v176, %v180
      %v183 = vmul.f32 %v174, %v181
      %v184 = vmul.f32 %v175, %v181
      %v185 = vld [vmem:[%s2] sm:$0x1]
      %v187 = vlaneseq
      %v188 = vshrl.u32 %v187, 7
      %v189 = vsub.s32 0, %v188
      %v190 = vrot.slane %v185, %v189
      %v192 = vadd.f32 %v183, %v190
      %v193 = vadd.f32 %v184, %v190
      %194 = vst [vmem:[%s172] sm:$0xff] %v192
      %195 = vst [vmem:[%s172 + $0x8] sm:$0xff] %v193
      %s196 = smul.u32 2, %s14
      %p197 = scmp.lt.s32.totalorder %s196, 3
      %s198 = scalar_select %p197, %s196, 3
      %s199 = smul.addr %s198, 8
      %s200 = scalar_lea.vmem %s3, %s199
      // Predicated region
      $region33: #{sep_conv_forward.3} parent=31 // pred_check
        %p201 = pneg %p100
      $region34: #{sep_conv_forward.3} parent=31 // pred_check_branch
        %203 = sbr.rel (%p201) target = $region36
      $region35: #{sep_conv_forward.3} parent=31 // pred_region
        %s204 = smul.u32 2, %s14
      $region36: #{sep_conv_forward.3} parent=31 // pred_fallthru
        _
    $region32: #{sep_conv_forward.3} parent=5 // pred_fallthru
      _
    %p205 = scmp.le.s32.totalorder 2, %s9
    // Predicated region
    $region37: #{sep_conv_forward.3} parent=5 // pred_check
      %p206 = pneg %p205
    $region38: #{sep_conv_forward.3} parent=5 // pred_check_branch
      %208 = sbr.rel (%p206) target = $region40
    $region39: #{sep_conv_forward.3} parent=5 // pred_region
      %s209 = ssub.s32 %s9, 2
      // Predicated region
      $region41: #{sep_conv_forward.3} parent=39 // pred_check
        %p210 = pneg %p106
      $region42: #{sep_conv_forward.3} parent=39 // pred_check_branch
        %212 = sbr.rel (%p210) target = $region44
      $region43: #{sep_conv_forward.3} parent=39 // pred_region
        %s213 = smul.u32 2, %s15
        %p214 = scmp.lt.s32.totalorder %s213, 3
        %s215 = scalar_select %p214, %s213, 3
        %s216 = smul.addr %s215, 8
        %s217 = scalar_lea.vmem %s3, %s216
      $region44: #{sep_conv_forward.3} parent=39 // pred_fallthru
        _
    $region40: #{sep_conv_forward.3} parent=5 // pred_fallthru
      _
  $region6: #{sep_conv_forward.3} parent=0 // loop_footer
    %s13 = sadd.s32 1, %s9
  $region7: #{sep_conv_forward.3} parent=0 // loop_footer_branch
    %8 = sbr.rel target = $region3
  $region8: #{sep_conv_forward.3} parent=0 // loop_exit
    _

// kernel: sep_conv_forward.2
$region0: #{sep_conv_forward.2}
  #allocation0 [shape = 'u32[]', space=smem, size = 0x4, offset = 0x4, fixed_abs, tag = 'smem constant byte address 0x4 - core index']
  #allocation1 [shape = 'u32[144,128]{1,0:T(1,128)}', space=vmem, size = 0x12000, scoped, tag = 'internal scratch']
  #allocation2 [shape = 'f32[1,18,18,4]{3,2,1,0:T(8,128)}', space=vmem, size = 0x36000, scoped, tag = 'scratch operand']
  %s0 = inlined_call_operand.vmem [shape: f32[2,18,18,4], index: 0, kind: input, shape index: {}]
  %s1 = inlined_call_operand.vmem [shape: f32[9,4], index: 1, kind: input, shape index: {}]
  %s2 = inlined_call_operand.vmem [shape: f32[4,8], index: 2, kind: input, shape index: {}]
  %s3 = inlined_call_operand.vmem [shape: f32[512,8], index: 3, kind: output, shape index: {0}]
  %s4 = inlined_call_operand.vmem [shape: f32[2,2,8], index: 4, kind: output, shape index: {1}]
  %5 = xla_tuple %s3, %s4
  %s6 = sld [smem:[#allocation0]]
  $region53: #{sep_conv_forward.2} parent=0
    _
  %s8 = ssub.s32 1, %s6
  %s9 = scalar_select 0, %s8, %s6
  loop: start=0, step=1, limit=4
  $region2: #{sep_conv_forward.2} parent=0 // loop_pre_header
    _
  $region3: #{sep_conv_forward.2} parent=0 // loop_header
    %s11 = sphi 0, %s15
    %p12 = scmp.ge.s32.totalorder %s11, 4
    %s21 = sphi 0, %s23
    %s24 = sphi 0, %s21
    %s25 = sphi 0, %s24
    %s41 = sphi 0, %s25
    %s45 = sphi 0, %s45
    %s47 = sphi 0, %s45
    %s48 = sphi 0, %s47
    %s62 = sphi 0, %s48
    %s66 = sphi 0, %s66
    %s68 = sphi 0, %s66
    %s69 = sphi 0, %s68
    %s83 = sphi 0, %s69
    %s89 = sphi 0, %s91
    %s92 = sphi 0, %s89
    %s93 = sphi 0, %s92
    %s109 = sphi 0, %s93
    %s115 = sphi 0, %s117
    %s118 = sphi 0, %s115
    %s119 = sphi 0, %s118
    %s135 = sphi 0, %s119
  $region4: #{sep_conv_forward.2} parent=0 // loop_header_branch
    %14 = sbr.rel (%p12) target = $region8
  $region5: #{sep_conv_forward.2} parent=0 // loop_body
    %s16 = ssub.s32 %s11, 1
    %s17 = ssub.s32 %s11, 2
    %s18 = sadd.s32 %s11, 1
    %s19 = ssub.s32 %s11, %s18
    %p20 = scmp.eq.s32.totalorder %s19, 0
    %s22 = sadd.s32 %s21, 1
    %s23 = scalar_select %p20, %s21, %s22
    %p26 = pneg %p20
    %p27 = scmp.eq.s32.totalorder %s11, 1
    %p28 = por %p26, %p27
    %p29 = scmp.ne.s32.totalorder %s21, %s24
    %p30 = scmp.eq.s32.totalorder %s11, 0
    %p31 = por %p29, %p30
    %p32 = scmp.ne.s32.totalorder %s21, %s24
    %p33 = scmp.eq.s32.totalorder %s16, 1
    %p34 = por %p32, %p33
    %p35 = scmp.ne.s32.totalorder %s24, %s25
    %p36 = scmp.eq.s32.totalorder %s16, 0
    %p37 = por %p35, %p36
    %p38 = scmp.ne.s32.totalorder %s24, %s25
    %p39 = scmp.eq.s32.totalorder %s17, 1
    %p40 = por %p38, %p39
    %p42 = scmp.ne.s32.totalorder %s25, %s41
    %p43 = scmp.eq.s32.totalorder %s17, 0
    %p44 = por %p42, %p43
    %s46 = sadd.s32 %s45, 1
    %p49 = scmp.eq.s32.totalorder %s11, 1
    %p50 = scmp.ne.s32.totalorder %s45, %s47
    %p51 = scmp.eq.s32.totalorder %s11, 0
    %p52 = por %p50, %p51
    %p53 = scmp.ne.s32.totalorder %s45, %s47
    %p54 = scmp.eq.s32.totalorder %s16, 1
    %p55 = por %p53, %p54
    %p56 = scmp.ne.s32.totalorder %s47, %s48
    %p57 = scmp.eq.s32.totalorder %s16, 0
    %p58 = por %p56, %p57
    %p59 = scmp.ne.s32.totalorder %s47, %s48
    %p60 = scmp.eq.s32.totalorder %s17, 1
    %p61 = por %p59, %p60
    %p63 = scmp.ne.s32.totalorder %s48, %s62
    %p64 = scmp.eq.s32.totalorder %s17, 0
    %p65 = por %p63, %p64
    %s67 = sadd.s32 %s66, 1
    %p70 = scmp.eq.s32.totalorder %s11, 1
    %p71 = scmp.ne.s32.totalorder %s66, %s68
    %p72 = scmp.eq.s32.totalorder %s11, 0
    %p73 = por %p71, %p72
    %p74 = scmp.ne.s32.totalorder %s66, %s68
    %p75 = scmp.eq.s32.totalorder %s16, 1
    %p76 = por %p74, %p75
    %p77 = scmp.ne.s32.totalorder %s68, %s69
    %p78 = scmp.eq.s32.totalorder %s16, 0
    %p79 = por %p77, %p78
    %p80 = scmp.ne.s32.totalorder %s68, %s69
    %p81 = scmp.eq.s32.totalorder %s17, 1
    %p82 = por %p80, %p81
    %p84 = scmp.ne.s32.totalorder %s69, %s83
    %p85 = scmp.eq.s32.totalorder %s17, 0
    %p86 = por %p84, %p85
    %s87 = ssub.s32 %s11, %s18
    %p88 = scmp.eq.s32.totalorder %s87, 0
    %s90 = sadd.s32 %s89, 1
    %s91 = scalar_select %p88, %s89, %s90
    %p94 = pneg %p88
    %p95 = scmp.eq.s32.totalorder %s11, 1
    %p96 = por %p94, %p95
    %p97 = scmp.ne.s32.totalorder %s89, %s92
    %p98 = scmp.eq.s32.totalorder %s11, 0
    %p99 = por %p97, %p98
    %p100 = scmp.ne.s32.totalorder %s89, %s92
    %p101 = scmp.eq.s32.totalorder %s16, 1
    %p102 = por %p100, %p101
    %p103 = scmp.ne.s32.totalorder %s92, %s93
    %p104 = scmp.eq.s32.totalorder %s16, 0
    %p105 = por %p103, %p104
    %p106 = scmp.ne.s32.totalorder %s92, %s93
    %p107 = scmp.eq.s32.totalorder %s17, 1
    %p108 = por %p106, %p107
    %p110 = scmp.ne.s32.totalorder %s93, %s109
    %p111 = scmp.eq.s32.totalorder %s17, 0
    %p112 = por %p110, %p111
    %s113 = ssub.s32 %s11, %s18
    %p114 = scmp.eq.s32.totalorder %s113, 0
    %s116 = sadd.s32 %s115, 1
    %s117 = scalar_select %p114, %s115, %s116
    %p120 = pneg %p114
    %p121 = scmp.eq.s32.totalorder %s11, 1
    %p122 = por %p120, %p121
    %p123 = scmp.ne.s32.totalorder %s115, %s118
    %p124 = scmp.eq.s32.totalorder %s11, 0
    %p125 = por %p123, %p124
    %p126 = scmp.ne.s32.totalorder %s115, %s118
    %p127 = scmp.eq.s32.totalorder %s16, 1
    %p128 = por %p126, %p127
    %p129 = scmp.ne.s32.totalorder %s118, %s119
    %p130 = scmp.eq.s32.totalorder %s16, 0
    %p131 = por %p129, %p130
    %p132 = scmp.ne.s32.totalorder %s118, %s119
    %p133 = scmp.eq.s32.totalorder %s17, 1
    %p134 = por %p132, %p133
    %p136 = scmp.ne.s32.totalorder %s119, %s135
    %p137 = scmp.eq.s32.totalorder %s17, 0
    %p138 = por %p136, %p137
    %p139 = scmp.le.s32.totalorder 1, %s11
    %p140 = scmp.lt.s32.totalorder %s11, 3
    %p141 = pnand %p139, %p140
    %p142 = pneg %p141
    // Predicated region
    $region9: #{sep_conv_forward.2} parent=5 // pred_check
      _
    $region10: #{sep_conv_forward.2} parent=5 // pred_check_branch
      %144 = sbr.rel (%p141) target = $region12
    $region11: #{sep_conv_forward.2} parent=5 // pred_region
      %s145 = ssub.s32 %s11, 1
      // Predicated region
      $region13: #{sep_conv_forward.2} parent=11 // pred_check
        %p146 = pneg %p58
      $region14: #{sep_conv_forward.2} parent=11 // pred_check_branch
        %148 = sbr.rel (%p146) target = $region16
      $region15: #{sep_conv_forward.2} parent=11 // pred_region
        _
      $region16: #{sep_conv_forward.2} parent=11 // pred_fallthru
        _
      // Predicated region
      $region17: #{sep_conv_forward.2} parent=11 // pred_check
        %p149 = pneg %p79
      $region18: #{sep_conv_forward.2} parent=11 // pred_check_branch
        %151 = sbr.rel (%p149) target = $region20
      $region19: #{sep_conv_forward.2} parent=11 // pred_region
        _
      $region20: #{sep_conv_forward.2} parent=11 // pred_fallthru
        _
    $region12: #{sep_conv_forward.2} parent=5 // pred_fallthru
      _
    %p152 = scmp.lt.s32.totalorder %s11, 2
    // Predicated region
    $region21: #{sep_conv_forward.2} parent=5 // pred_check
      %p153 = pneg %p152
    $region22: #{sep_conv_forward.2} parent=5 // pred_check_branch
      %155 = sbr.rel (%p153) target = $region24
    $region23: #{sep_conv_forward.2} parent=5 // pred_region
      // Predicated region
      $region25: #{sep_conv_forward.2} parent=23 // pred_check
        %p156 = pneg %p31
      $region26: #{sep_conv_forward.2} parent=23 // pred_check_branch
        %158 = sbr.rel (%p156) target = $region28
      $region27: #{sep_conv_forward.2} parent=23 // pred_region
        %p159 = scmp.lt.s32.totalorder %s11, 1
        %s160 = scalar_select %p159, %s11, 1
        %s161 = smul.addr %s160, 54
        %s162 = smul.addr %s161, 8
        %s163 = scalar_lea.vmem %s0, %s162
      $region28: #{sep_conv_forward.2} parent=23 // pred_fallthru
        _
    $region24: #{sep_conv_forward.2} parent=5 // pred_fallthru
      _
    %p164 = scmp.le.s32.totalorder 1, %s11
    %p165 = scmp.lt.s32.totalorder %s11, 3
    %p166 = pnand %p164, %p165
    %p167 = pneg %p166
    // Predicated region
    $region29: #{sep_conv_forward.2} parent=5 // pred_check
      _
    $region30: #{sep_conv_forward.2} parent=5 // pred_check_branch
      %169 = sbr.rel (%p166) target = $region32
    $region31: #{sep_conv_forward.2} parent=5 // pred_region
      %s170 = ssub.s32 %s11, 1
      %p171 = scmp.lt.s32.totalorder %s16, 1
      %s172 = scalar_select %p171, %s16, 1
      %s173 = smul.addr %s172, 54
      %s174 = smul.addr %s173, 8
      %s175 = scalar_lea.vmem %s0, %s174
      %p176 = pneg %p37
      %p177 = pneg %p34
      %p178 = pneg %p58
      %p179 = pneg %p55
      %p180 = pneg %p79
      %p181 = pneg %p76
      %p182 = pneg %p105
      %p183 = pneg %p102
      %s184 = smul.u32 32, %s16
      %p185 = scmp.lt.s32.totalorder %s184, 63
      %s186 = scalar_select %p185, %s184, 63
      %s187 = smul.addr %s186, 8
      %s188 = scalar_lea.vmem %s3, %s187
      %p189 = pneg %p131
      %p190 = pneg %p128
      %p191 = scmp.lt.s32.totalorder %s16, 1
      %s192 = scalar_select %p191, %s16, 1
      %s193 = smul.addr %s192, 2
      %s194 = scalar_lea.vmem %s4, %s193
      %p195 = scmp.lt.s32.totalorder %s16, 1
      %s196 = scalar_select %p195, %s16, 1
      %s197 = smul.addr %s196, 54
      %s198 = smul.addr %s197, 8
      %s199 = scalar_lea.vmem %s0, %s198
      %s200 = smul.u32 32, %s16
      %p201 = scmp.lt.s32.totalorder %s200, 63
      %s202 = scalar_select %p201, %s200, 63
      %s203 = smul.addr %s202, 8
      %s204 = scalar_lea.vmem %s3, %s203
      %s205 = smul.u32 32, %s16
      %p206 = scmp.lt.s32.totalorder %s16, 1
      %s207 = scalar_select %p206, %s16, 1
      %s208 = smul.addr %s207, 2
      %s209 = scalar_lea.vmem %s4, %s208
      %v210 = vld [vmem:[%s199] sm:$0xff]
      %v211 = vld [vmem:[%s199 + $0x8] sm:$0xff]
      %v212 = vld [vmem:[%s199 + $0x10] sm:$0x3]
      %v213 = vld [vmem:[%s199 + $0x18] sm:$0xff]
      %v214 = vld [vmem:[%s199 + $0x20] sm:$0xff]
      %v215 = vld [vmem:[%s199 + $0x28] sm:$0x3]
      %v216 = vld [vmem:[%s199 + $0x30] sm:$0xff]
      %v217 = vld [vmem:[%s199 + $0x38] sm:$0xff]
      %v218 = vld [vmem:[%s199 + $0x40] sm:$0x3]
      %v219 = vld [vmem:[%s199 + $0x48] sm:$0xff]
      %v220 = vld [vmem:[%s199 + $0x50] sm:$0xff]
      %v221 = vld [vmem:[%s199 + $0x58] sm:$0x3]
      %v222 = vld [vmem:[%s199 + $0x60] sm:$0xff]
      %v223 = vld [vmem:[%s199 + $0x68] sm:$0xff]
      %v224 = vld [vmem:[%s199 + $0x70] sm:$0x3]
      %v225 = vld [vmem:[%s199 + $0x78] sm:$0xff]
      %v226 = vld [vmem:[%s199 + $0x80] sm:$0xff]
      %v227 = vld [vmem:[%s199 + $0x88] sm:$0x3]
      %v228 = vld [vmem:[%s199 + $0x90] sm:$0xff]
      %v229 = vld [vmem:[%s199 + $0x98] sm:$0xff]
      %v230 = vld [vmem:[%s199 + $0xa0] sm:$0x3]
      %v231 = vld [vmem:[%s199 + $0xa8] sm:$0xff]
      %v232 = vld [vmem:[%s199 + $0xb0] sm:$0xff]
      %v233 = vld [vmem:[%s199 + $0xb8] sm:$0x3]
      %v234 = vld [vmem:[%s199 + $0xc0] sm:$0xff]
      %v235 = vld [vmem:[%s199 + $0xc8] sm:$0xff]
      %v236 = vld [vmem:[%s199 + $0xd0] sm:$0x3]
      %v237 = vld [vmem:[%s199 + $0xd8] sm:$0xff]
      %v238 = vld [vmem:[%s199 + $0xe0] sm:$0xff]
      %v239 = vld [vmem:[%s199 + $0xe8] sm:$0x3]
      %v240 = vld [vmem:[%s199 + $0xf0] sm:$0xff]
      %v241 = vld [vmem:[%s199 + $0xf8] sm:$0xff]
      %v242 = vld [vmem:[%s199 + $0x100] sm:$0x3]
      %v243 = vld [vmem:[%s199 + $0x108] sm:$0xff]
      %v244 = vld [vmem:[%s199 + $0x110] sm:$0xff]
      %v245 = vld [vmem:[%s199 + $0x118] sm:$0x3]
      %v246 = vld [vmem:[%s199 + $0x120] sm:$0xff]
      %v247 = vld [vmem:[%s199 + $0x128] sm:$0xff]
      %v248 = vld [vmem:[%s199 + $0x130] sm:$0x3]
      %v249 = vld [vmem:[%s199 + $0x138] sm:$0xff]
      %v250 = vld [vmem:[%s199 + $0x140] sm:$0xff]
      %v251 = vld [vmem:[%s199 + $0x148] sm:$0x3]
      %v252 = vld [vmem:[%s199 + $0x150] sm:$0xff]
      %v253 = vld [vmem:[%s199 + $0x158] sm:$0xff]
      %v254 = vld [vmem:[%s199 + $0x160] sm:$0x3]
      %v255 = vld [vmem:[%s199 + $0x168] sm:$0xff]
      %v256 = vld [vmem:[%s199 + $0x170] sm:$0xff]
      %v257 = vld [vmem:[%s199 + $0x178] sm:$0x3]
      %v258 = vld [vmem:[%s199 + $0x180] sm:$0xff]
      %v259 = vld [vmem:[%s199 + $0x188] sm:$0xff]
      %v260 = vld [vmem:[%s199 + $0x190] sm:$0x3]
      %v261 = vld [vmem:[%s199 + $0x198] sm:$0xff]
      %v262 = vld [vmem:[%s199 + $0x1a0] sm:$0xff]
      %v263 = vld [vmem:[%s199 + $0x1a8] sm:$0x3]
      %v264 = vmax.f32 %v210, 0.0
      %v265 = vmax.f32 %v211, 0.0
      %v266 = vmax.f32 %v212, 0.0
      %v267 = vmax.f32 %v213, 0.0
      %v268 = vmax.f32 %v214, 0.0
      %v269 = vmax.f32 %v215, 0.0
      %v270 = vmax.f32 %v216, 0.0
      %v271 = vmax.f32 %v217, 0.0
      %v272 = vmax.f32 %v218, 0.0
      %v273 = vmax.f32 %v219, 0.0
      %v274 = vmax.f32 %v220, 0.0
      %v275 = vmax.f32 %v221, 0.0
      %v276 = vmax.f32 %v222, 0.0
      %v277 = vmax.f32 %v223, 0.0
      %v278 = vmax.f32 %v224, 0.0
      %v279 = vmax.f32 %v225, 0.0
      %v280 = vmax.f32 %v226, 0.0
      %v281 = vmax.f32 %v227, 0.0
      %v282 = vmax.f32 %v228, 0.0
      %v283 = vmax.f32 %v229, 0.0
      %v284 = vmax.f32 %v230, 0.0
      %v285 = vmax.f32 %v231, 0.0
      %v286 = vmax.f32 %v232, 0.0
      %v287 = vmax.f32 %v233, 0.0
      %v288 = vmax.f32 %v234, 0.0
      %v289 = vmax.f32 %v235, 0.0
      %v290 = vmax.f32 %v236, 0.0
      %v291 = vmax.f32 %v237, 0.0
      %v292 = vmax.f32 %v238, 0.0
      %v293 = vmax.f32 %v239, 0.0
      %v294 = vmax.f32 %v240, 0.0
      %v295 = vmax.f32 %v241, 0.0
      %v296 = vmax.f32 %v242, 0.0
      %v297 = vmax.f32 %v243, 0.0
      %v298 = vmax.f32 %v244, 0.0
      %v299 = vmax.f32 %v245, 0.0
      %v300 = vmax.f32 %v246, 0.0
      %v301 = vmax.f32 %v247, 0.0
      %v302 = vmax.f32 %v248, 0.0
      %v303 = vmax.f32 %v249, 0.0
      %v304 = vmax.f32 %v250, 0.0
      %v305 = vmax.f32 %v251, 0.0
      %v306 = vmax.f32 %v252, 0.0
      %v307 = vmax.f32 %v253, 0.0
      %v308 = vmax.f32 %v254, 0.0
      %v309 = vmax.f32 %v255, 0.0
      %v310 = vmax.f32 %v256, 0.0
      %v311 = vmax.f32 %v257, 0.0
      %v312 = vmax.f32 %v258, 0.0
      %v313 = vmax.f32 %v259, 0.0
      %v314 = vmax.f32 %v260, 0.0
      %v315 = vmax.f32 %v261, 0.0
      %v316 = vmax.f32 %v262, 0.0
      %v317 = vmax.f32 %v263, 0.0
      %vm318 = vcmask 31744
      %319 = vst.msk [vmem:[#allocation2] sm:$0xff] %vm318, %v264
      %320 = vst.msk [vmem:[#allocation2 + $0x8] sm:$0xff] %vm318, %v265
      %vm321 = vcmask 25600
      %322 = vst.msk [vmem:[#allocation2 + $0x10] sm:$0x3] %vm321, %v266
      %323 = vst.msk [vmem:[#allocation2 + $0x18] sm:$0xff] %vm318, %v267
      %324 = vst.msk [vmem:[#allocation2 + $0x20] sm:$0xff] %vm318, %v268
      %325 = vst.msk [vmem:[#allocation2 + $0x28] sm:$0x3] %vm321, %v269
      %326 = vst.msk [vmem:[#allocation2 + $0x30] sm:$0xff] %vm318, %v270
      %327 = vst.msk [vmem:[#allocation2 + $0x38] sm:$0xff] %vm318, %v271
      %328 = vst.msk [vmem:[#allocation2 + $0x40] sm:$0x3] %vm321, %v272
      %329 = vst.msk [vmem:[#allocation2 + $0x48] sm:$0xff] %vm318, %v273
      %330 = vst.msk [vmem:[#allocation2 + $0x50] sm:$0xff] %vm318, %v274
      %331 = vst.msk [vmem:[#allocation2 + $0x58] sm:$0x3] %vm321, %v275
      %332 = vst.msk [vmem:[#allocation2 + $0x60] sm:$0xff] %vm318, %v276
      %333 = vst.msk [vmem:[#allocation2 + $0x68] sm:$0xff] %vm318, %v277
      %334 = vst.msk [vmem:[#allocation2 + $0x70] sm:$0x3] %vm321, %v278
      %335 = vst.msk [vmem:[#allocation2 + $0x78] sm:$0xff] %vm318, %v279
      %336 = vst.msk [vmem:[#allocation2 + $0x80] sm:$0xff] %vm318, %v280
      %337 = vst.msk [vmem:[#allocation2 + $0x88] sm:$0x3] %vm321, %v281
      %338 = vst.msk [vmem:[#allocation2 + $0x90] sm:$0xff] %vm318, %v282
      %339 = vst.msk [vmem:[#allocation2 + $0x98] sm:$0xff] %vm318, %v283
      %340 = vst.msk [vmem:[#allocation2 + $0xa0] sm:$0x3] %vm321, %v284
      %341 = vst.msk [vmem:[#allocation2 + $0xa8] sm:$0xff] %vm318, %v285
      %342 = vst.msk [vmem:[#allocation2 + $0xb0] sm:$0xff] %vm318, %v286
      %343 = vst.msk [vmem:[#allocation2 + $0xb8] sm:$0x3] %vm321, %v287
      %344 = vst.msk [vmem:[#allocation2 + $0xc0] sm:$0xff] %vm318, %v288
      %345 = vst.msk [vmem:[#allocation2 + $0xc8] sm:$0xff] %vm318, %v289
      %346 = vst.msk [vmem:[#allocation2 + $0xd0] sm:$0x3] %vm321, %v290
      %347 = vst.msk [vmem:[#allocation2 + $0xd8] sm:$0xff] %vm318, %v291
      %348 = vst.msk [vmem:[#allocation2 + $0xe0] sm:$0xff] %vm318, %v292
      %349 = vst.msk [vmem:[#allocation2 + $0xe8] sm:$0x3] %vm321, %v293
      %350 = vst.msk [vmem:[#allocation2 + $0xf0] sm:$0xff] %vm318, %v294
      %351 = vst.msk [vmem:[#allocation2 + $0xf8] sm:$0xff] %vm318, %v295
      %352 = vst.msk [vmem:[#allocation2 + $0x100] sm:$0x3] %vm321, %v296
      %353 = vst.msk [vmem:[#allocation2 + $0x108] sm:$0xff] %vm318, %v297
      %354 = vst.msk [vmem:[#allocation2 + $0x110] sm:$0xff] %vm318, %v298
      %355 = vst.msk [vmem:[#allocation2 + $0x118] sm:$0x3] %vm321, %v299
      %356 = vst.msk [vmem:[#allocation2 + $0x120] sm:$0xff] %vm318, %v300
      %357 = vst.msk [vmem:[#allocation2 + $0x128] sm:$0xff] %vm318, %v301
      %358 = vst.msk [vmem:[#allocation2 + $0x130] sm:$0x3] %vm321, %v302
      %359 = vst.msk [vmem:[#allocation2 + $0x138] sm:$0xff] %vm318, %v303
      %360 = vst.msk [vmem:[#allocation2 + $0x140] sm:$0xff] %vm318, %v304
      %361 = vst.msk [vmem:[#allocation2 + $0x148] sm:$0x3] %vm321, %v305
      %362 = vst.msk [vmem:[#allocation2 + $0x150] sm:$0xff] %vm318, %v306
      %363 = vst.msk [vmem:[#allocation2 + $0x158] sm:$0xff] %vm318, %v307
      %364 = vst.msk [vmem:[#allocation2 + $0x160] sm:$0x3] %vm321, %v308
      %365 = vst.msk [vmem:[#allocation2 + $0x168] sm:$0xff] %vm318, %v309
      %366 = vst.msk [vmem:[#allocation2 + $0x170] sm:$0xff] %vm318, %v310
      %367 = vst.msk [vmem:[#allocation2 + $0x178] sm:$0x3] %vm321, %v311
      %368 = vst.msk [vmem:[#allocation2 + $0x180] sm:$0xff] %vm318, %v312
      %369 = vst.msk [vmem:[#allocation2 + $0x188] sm:$0xff] %vm318, %v313
      %370 = vst.msk [vmem:[#allocation2 + $0x190] sm:$0x3] %vm321, %v314
      %371 = vst.msk [vmem:[#allocation2 + $0x198] sm:$0xff] %vm318, %v315
      %372 = vst.msk [vmem:[#allocation2 + $0x1a0] sm:$0xff] %vm318, %v316
      %373 = vst.msk [vmem:[#allocation2 + $0x1a8] sm:$0x3] %vm321, %v317
      %v374 = vld [vmem:[#allocation2] sm:$0xff]
      %v375 = vld [vmem:[#allocation2 + $0x8] sm:$0xff]
      %v376 = vld [vmem:[#allocation2 + $0x18] sm:$0xff]
      %v377 = vld [vmem:[#allocation2 + $0x20] sm:$0xff]
      %v378 = vld [vmem:[#allocation2 + $0x30] sm:$0xff]
      %v379 = vld [vmem:[#allocation2 + $0x38] sm:$0xff]
      %v380 = vld [vmem:[#allocation2 + $0x48] sm:$0xff]
      %v381 = vld [vmem:[#allocation2 + $0x50] sm:$0xff]
      %v382 = vld [vmem:[#allocation2 + $0x60] sm:$0xff]
      %v383 = vld [vmem:[#allocation2 + $0x68] sm:$0xff]
      %v384 = vld [vmem:[#allocation2 + $0x78] sm:$0xff]
      %v385 = vld [vmem:[#allocation2 + $0x80] sm:$0xff]
      %v386 = vld [vmem:[#allocation2 + $0x90] sm:$0xff]
      %v387 = vld [vmem:[#allocation2 + $0x98] sm:$0xff]
      %v388 = vld [vmem:[#allocation2 + $0xa8] sm:$0xff]
      %v389 = vld [vmem:[#allocation2 + $0xb0] sm:$0xff]
      %v390 = vld [vmem:[#allocation2 + $0xc0] sm:$0xff]
      %v391 = vld [vmem:[#allocation2 + $0xc8] sm:$0xff]
      %v392 = vld [vmem:[#allocation2 + $0xd8] sm:$0xff]
      %v393 = vld [vmem:[#allocation2 + $0xe0] sm:$0xff]
      %v394 = vld [vmem:[#allocation2 + $0xf0] sm:$0xff]
      %v395 = vld [vmem:[#allocation2 + $0xf8] sm:$0xff]
      %v396 = vld [vmem:[#allocation2 + $0x108] sm:$0xff]
      %v397 = vld [vmem:[#allocation2 + $0x110] sm:$0xff]
      %v398 = vld [vmem:[#allocation2 + $0x120] sm:$0xff]
      %v399 = vld [vmem:[#allocation2 + $0x128] sm:$0xff]
      %v400 = vld [vmem:[#allocation2 + $0x138] sm:$0xff]
      %v401 = vld [vmem:[#allocation2 + $0x140] sm:$0xff]
      %v402 = vld [vmem:[#allocation2 + $0x150] sm:$0xff]
      %v403 = vld [vmem:[#allocation2 + $0x158] sm:$0xff]
      %v404 = vld [vmem:[#allocation2 + $0x168] sm:$0xff]
      %v405 = vld [vmem:[#allocation2 + $0x170] sm:$0xff]
      %v406 = vld [vmem:[%s1] sm:$0x1]
      %v407 = vlaneseq
      %v408 = vshrl.u32 %v407, 7
      %v409 = vsub.s32 0, %v408
      %v410 = vrot.slane %v406, %v409
      %v411 = vmul.f32 %v374, %v410
      %v412 = vmul.f32 %v375, %v410
      %v413 = vmul.f32 %v376, %v410
      %v414 = vmul.f32 %v377, %v410
      %v415 = vmul.f32 %v378, %v410
      %v416 = vmul.f32 %v379, %v410
      %v417 = vmul.f32 %v380, %v410
      %v418 = vmul.f32 %v381, %v410
      %v419 = vmul.f32 %v382, %v410
      %v420 = vmul.f32 %v383, %v410
      %v421 = vmul.f32 %v384, %v410
      %v422 = vmul.f32 %v385, %v410
      %v423 = vmul.f32 %v386, %v410
      %v424 = vmul.f32 %v387, %v410
      %v425 = vmul.f32 %v388, %v410
      %v426 = vmul.f32 %v389, %v410
      %v427 = vmul.f32 %v390, %v410
      %v428 = vmul.f32 %v391, %v410
      %v429 = vmul.f32 %v392, %v410
      %v430 = vmul.f32 %v393, %v410
      %v431 = vmul.f32 %v394, %v410
      %v432 = vmul.f32 %v395, %v410
      %v433 = vmul.f32 %v396, %v410
      %v434 = vmul.f32 %v397, %v410
      %v435 = vmul.f32 %v398, %v410
      %v436 = vmul.f32 %v399, %v410
      %v437 = vmul.f32 %v400, %v410
      %v438 = vmul.f32 %v401, %v410
      %v439 = vmul.f32 %v402, %v410
      %v440 = vmul.f32 %v403, %v410
      %v441 = vmul.f32 %v404, %v410
      %v442 = vmul.f32 %v405, %v410
      %v443 = vld [vmem:[#allocation2 + $0x1] sm:$0xff]
      %v444 = vld [vmem:[#allocation2 + $0x9] sm:$0xff]
      %v445 = vld [vmem:[#allocation2 + $0x19] sm:$0xff]
      %v446 = vld [vmem:[#allocation2 + $0x21] sm:$0xff]
      %v447 = vld [vmem:[#allocation2 + $0x31] sm:$0xff]
      %v448 = vld [vmem:[#allocation2 + $0x39] sm:$0xff]
      %v449 = vld [vmem:[#allocation2 + $0x49] sm:$0xff]
      %v450 = vld [vmem:[#allocation2 + $0x51] sm:$0xff]
      %v451 = vld [vmem:[#allocation2 + $0x61] sm:$0xff]
      %v452 = vld [vmem:[#allocation2 + $0x69] sm:$0xff]
      %v453 = vld [vmem:[#allocation2 + $0x79] sm:$0xff]
      %v454 = vld [vmem:[#allocation2 + $0x81] sm:$0xff]
      %v455 = vld [vmem:[#allocation2 + $0x91] sm:$0xff]
      %v456 = vld [vmem:[#allocation2 + $0x99] sm:$0xff]
      %v457 = vld [vmem:[#allocation2 + $0xa9] sm:$0xff]
      %v458 = vld [vmem:[#allocation2 + $0xb1] sm:$0xff]
      %v459 = vld [vmem:[#allocation2 + $0xc1] sm:$0xff]
      %v460 = vld [vmem:[#allocation2 + $0xc9] sm:$0xff]
      %v461 = vld [vmem:[#allocation2 + $0xd9] sm:$0xff]
      %v462 = vld [vmem:[#allocation2 + $0xe1] sm:$0xff]
      %v463 = vld [vmem:[#allocation2 + $0xf1] sm:$0xff]
      %v464 = vld [vmem:[#allocation2 + $0xf9] sm:$0xff]
      %v465 = vld [vmem:[#allocation2 + $0x109] sm:$0xff]
      %v466 = vld [vmem:[#allocation2 + $0x111] sm:$0xff]
      %v467 = vld [vmem:[#allocation2 + $0x121] sm:$0xff]
      %v468 = vld [vmem:[#allocation2 + $0x129] sm:$0xff]
      %v469 = vld [vmem:[#allocation2 + $0x139] sm:$0xff]
      %v470 = vld [vmem:[#allocation2 + $0x141] sm:$0xff]
      %v471 = vld [vmem:[#allocation2 + $0x151] sm:$0xff]
      %v472 = vld [vmem:[#allocation2 + $0x159] sm:$0xff]
      %v473 = vld [vmem:[#allocation2 + $0x169] sm:$0xff]
      %v474 = vld [vmem:[#allocation2 + $0x171] sm:$0xff]
      %v475 = vld [vmem:[%s1 + $0x1] sm:$0x1]
      %v476 = vlaneseq
      %v477 = vshrl.u32 %v476, 7
      %v478 = vsub.s32 0, %v477
      %v479 = vrot.slane %v475, %v478
      %v480 = vmul.f32 %v443, %v479
      %v481 = vmul.f32 %v444, %v479
      %v482 = vmul.f32 %v445, %v479
      %v483 = vmul.f32 %v446, %v479
      %v484 = vmul.f32 %v447, %v479
      %v485 = vmul.f32 %v448, %v479
      %v486 = vmul.f32 %v449, %v479
      %v487 = vmul.f32 %v450, %v479
      %v488 = vmul.f32 %v451, %v479
      %v489 = vmul.f32 %v452, %v479
      %v490 = vmul.f32 %v453, %v479
      %v491 = vmul.f32 %v454, %v479
      %v492 = vmul.f32 %v455, %v479
      %v493 = vmul.f32 %v456, %v479
      %v494 = vmul.f32 %v457, %v479
      %v495 = vmul.f32 %v458, %v479
      %v496 = vmul.f32 %v459, %v479
      %v497 = vmul.f32 %v460, %v479
      %v498 = vmul.f32 %v461, %v479
      %v499 = vmul.f32 %v462, %v479
      %v500 = vmul.f32 %v463, %v479
      %v501 = vmul.f32 %v464, %v479
      %v502 = vmul.f32 %v465, %v479
      %v503 = vmul.f32 %v466, %v479
      %v504 = vmul.f32 %v467, %v479
      %v505 = vmul.f32 %v468, %v479
      %v506 = vmul.f32 %v469, %v479
      %v507 = vmul.f32 %v470, %v479
      %v508 = vmul.f32 %v471, %v479
      %v509 = vmul.f32 %v472, %v479
      %v510 = vmul.f32 %v473, %v479
      %v511 = vmul.f32 %v474, %v479
      %v512 = vadd.f32 %v411, %v480
      %v513 = vadd.f32 %v412, %v481
      %v514 = vadd.f32 %v413, %v482
      %v515 = vadd.f32 %v414, %v483
      %v516 = vadd.f32 %v415, %v484
      %v517 = vadd.f32 %v416, %v485
      %v518 = vadd.f32 %v417, %v486
      %v519 = vadd.f32 %v418, %v487
      %v520 = vadd.f32 %v419, %v488
      %v521 = vadd.f32 %v420, %v489
      %v522 = vadd.f32 %v421, %v490
      %v523 = vadd.f32 %v422, %v491
      %v524 = vadd.f32 %v423, %v492
      %v525 = vadd.f32 %v424, %v493
      %v526 = vadd.f32 %v425, %v494
      %v527 = vadd.f32 %v426, %v495
      %v528 = vadd.f32 %v427, %v496
      %v529 = vadd.f32 %v428, %v497
      %v530 = vadd.f32 %v429, %v498
      %v531 = vadd.f32 %v430, %v499
      %v532 = vadd.f32 %v431, %v500
      %v533 = vadd.f32 %v432, %v501
      %v534 = vadd.f32 %v433, %v502
      %v535 = vadd.f32 %v434, %v503
      %v536 = vadd.f32 %v435, %v504
      %v537 = vadd.f32 %v436, %v505
      %v538 = vadd.f32 %v437, %v506
      %v539 = vadd.f32 %v438, %v507
      %v540 = vadd.f32 %v439, %v508
      %v541 = vadd.f32 %v440, %v509
      %v542 = vadd.f32 %v441, %v510
      %v543 = vadd.f32 %v442, %v511
      %v544 = vld [vmem:[#allocation2 + $0x2] sm:$0xff]
      %v545 = vld [vmem:[#allocation2 + $0xa] sm:$0xff]
      %v546 = vld [vmem:[#allocation2 + $0x1a] sm:$0xff]
      %v547 = vld [vmem:[#allocation2 + $0x22] sm:$0xff]
      %v548 = vld [vmem:[#allocation2 + $0x32] sm:$0xff]
      %v549 = vld [vmem:[#allocation2 + $0x3a] sm:$0xff]
      %v550 = vld [vmem:[#allocation2 + $0x4a] sm:$0xff]
      %v551 = vld [vmem:[#allocation2 + $0x52] sm:$0xff]
      %v552 = vld [vmem:[#allocation2 + $0x62] sm:$0xff]
      %v553 = vld [vmem:[#allocation2 + $0x6a] sm:$0xff]
      %v554 = vld [vmem:[#allocation2 + $0x7a] sm:$0xff]
      %v555 = vld [vmem:[#allocation2 + $0x82] sm:$0xff]
      %v556 = vld [vmem:[#allocation2 + $0x92] sm:$0xff]
      %v557 = vld [vmem:[#allocation2 + $0x9a] sm:$0xff]
      %v558 = vld [vmem:[#allocation2 + $0xaa] sm:$0xff]
      %v559 = vld [vmem:[#allocation2 + $0xb2] sm:$0xff]
      %v560 = vld [vmem:[#allocation2 + $0xc2] sm:$0xff]
      %v561 = vld [vmem:[#allocation2 + $0xca] sm:$0xff]
      %v562 = vld [vmem:[#allocation2 + $0xda] sm:$0xff]
      %v563 = vld [vmem:[#allocation2 + $0xe2] sm:$0xff]
      %v564 = vld [vmem:[#allocation2 + $0xf2] sm:$0xff]
      %v565 = vld [vmem:[#allocation2 + $0xfa] sm:$0xff]
      %v566 = vld [vmem:[#allocation2 + $0x10a] sm:$0xff]
      %v567 = vld [vmem:[#allocation2 + $0x112] sm:$0xff]
      %v568 = vld [vmem:[#allocation2 + $0x122] sm:$0xff]
      %v569 = vld [vmem:[#allocation2 + $0x12a] sm:$0xff]
      %v570 = vld [vmem:[#allocation2 + $0x13a] sm:$0xff]
      %v571 = vld [vmem:[#allocation2 + $0x142] sm:$0xff]
      %v572 = vld [vmem:[#allocation2 + $0x152] sm:$0xff]
      %v573 = vld [vmem:[#allocation2 + $0x15a] sm:$0xff]
      %v574 = vld [vmem:[#allocation2 + $0x16a] sm:$0xff]
      %v575 = vld [vmem:[#allocation2 + $0x172] sm:$0xff]
      %v576 = vld [vmem:[%s1 + $0x2] sm:$0x1]
      %v577 = vlaneseq
      %v578 = vshrl.u32 %v577, 7
      %v579 = vsub.s32 0, %v578
      %v580 = vrot.slane %v576, %v579
      %v581 = vmul.f32 %v544, %v580
      %v582 = vmul.f32 %v545, %v580
      %v583 = vmul.f32 %v546, %v580
      %v584 = vmul.f32 %v547, %v580
      %v585 = vmul.f32 %v548, %v580
      %v586 = vmul.f32 %v549, %v580
      %v587 = vmul.f32 %v550, %v580
      %v588 = vmul.f32 %v551, %v580
      %v589 = vmul.f32 %v552, %v580
      %v590 = vmul.f32 %v553, %v580
      %v591 = vmul.f32 %v554, %v580
      %v592 = vmul.f32 %v555, %v580
      %v593 = vmul.f32 %v556, %v580
      %v594 = vmul.f32 %v557, %v580
      %v595 = vmul.f32 %v558, %v580
      %v596 = vmul.f32 %v559, %v580
      %v597 = vmul.f32 %v560, %v580
      %v598 = vmul.f32 %v561, %v580
      %v599 = vmul.f32 %v562, %v580
      %v600 = vmul.f32 %v563, %v580
      %v601 = vmul.f32 %v564, %v580
      %v602 = vmul.f32 %v565, %v580
      %v603 = vmul.f32 %v566, %v580
      %v604 = vmul.f32 %v567, %v580
      %v605 = vmul.f32 %v568, %v580
      %v606 = vmul.f32 %v569, %v580
      %v607 = vmul.f32 %v570, %v580
      %v608 = vmul.f32 %v571, %v580
      %v609 = vmul.f32 %v572, %v580
      %v610 = vmul.f32 %v573, %v580
      %v611 = vmul.f32 %v574, %v580
      %v612 = vmul.f32 %v575, %v580
      %v613 = vadd.f32 %v512, %v581
      %v614 = vadd.f32 %v513, %v582
      %v615 = vadd.f32 %v514, %v583
      %v616 = vadd.f32 %v515, %v584
      %v617 = vadd.f32 %v516, %v585
      %v618 = vadd.f32 %v517, %v586
      %v619 = vadd.f32 %v518, %v587
      %v620 = vadd.f32 %v519, %v588
      %v621 = vadd.f32 %v520, %v589
      %v622 = vadd.f32 %v521, %v590
      %v623 = vadd.f32 %v522, %v591
      %v624 = vadd.f32 %v523, %v592
      %v625 = vadd.f32 %v524, %v593
      %v626 = vadd.f32 %v525, %v594
      %v627 = vadd.f32 %v526, %v595
      %v628 = vadd.f32 %v527, %v596
      %v629 = vadd.f32 %v528, %v597
      %v630 = vadd.f32 %v529, %v598
      %v631 = vadd.f32 %v530, %v599
      %v632 = vadd.f32 %v531, %v600
      %v633 = vadd.f32 %v532, %v601
      %v634 = vadd.f32 %v533, %v602
      %v635 = vadd.f32 %v534, %v603
      %v636 = vadd.f32 %v535, %v604
      %v637 = vadd.f32 %v536, %v605
      %v638 = vadd.f32 %v537, %v606
      %v639 = vadd.f32 %v538, %v607
      %v640 = vadd.f32 %v539, %v608
      %v641 = vadd.f32 %v540, %v609
      %v642 = vadd.f32 %v541, %v610
      %v643 = vadd.f32 %v542, %v611
      %v644 = vadd.f32 %v543, %v612
      %s645 = scalar_lea.vmem [#allocation2], 24
      %v646 = vld [vmem:[%s645] sm:$0xff]
      %v647 = vld [vmem:[%s645 + $0x8] sm:$0xff]
      %v648 = vld [vmem:[%s645 + $0x18] sm:$0xff]
      %v649 = vld [vmem:[%s645 + $0x20] sm:$0xff]
      %v650 = vld [vmem:[%s645 + $0x30] sm:$0xff]
      %v651 = vld [vmem:[%s645 + $0x38] sm:$0xff]
      %v652 = vld [vmem:[%s645 + $0x48] sm:$0xff]
      %v653 = vld [vmem:[%s645 + $0x50] sm:$0xff]
      %v654 = vld [vmem:[%s645 + $0x60] sm:$0xff]
      %v655 = vld [vmem:[%s645 + $0x68] sm:$0xff]
      %v656 = vld [vmem:[%s645 + $0x78] sm:$0xff]
      %v657 = vld [vmem:[%s645 + $0x80] sm:$0xff]
      %v658 = vld [vmem:[%s645 + $0x90] sm:$0xff]
      %v659 = vld [vmem:[%s645 + $0x98] sm:$0xff]
      %v660 = vld [vmem:[%s645 + $0xa8] sm:$0xff]
      %v661 = vld [vmem:[%s645 + $0xb0] sm:$0xff]
      %v662 = vld [vmem:[%s645 + $0xc0] sm:$0xff]
      %v663 = vld [vmem:[%s645 + $0xc8] sm:$0xff]
      %v664 = vld [vmem:[%s645 + $0xd8] sm:$0xff]
      %v665 = vld [vmem:[%s645 + $0xe0] sm:$0xff]
      %v666 = vld [vmem:[%s645 + $0xf0] sm:$0xff]
      %v667 = vld [vmem:[%s645 + $0xf8] sm:$0xff]
      %v668 = vld [vmem:[%s645 + $0x108] sm:$0xff]
      %v669 = vld [vmem:[%s645 + $0x110] sm:$0xff]
      %v670 = vld [vmem:[%s645 + $0x120] sm:$0xff]
      %v671 = vld [vmem:[%s645 + $0x128] sm:$0xff]
      %v672 = vld [vmem:[%s645 + $0x138] sm:$0xff]
      %v673 = vld [vmem:[%s645 + $0x140] sm:$0xff]
      %v674 = vld [vmem:[%s645 + $0x150] sm:$0xff]
      %v675 = vld [vmem:[%s645 + $0x158] sm:$0xff]
      %v676 = vld [vmem:[%s645 + $0x168] sm:$0xff]
      %v677 = vld [vmem:[%s645 + $0x170] sm:$0xff]
      %v678 = vld [vmem:[%s1 + $0x3] sm:$0x1]
      %v679 = vlaneseq
      %v680 = vshrl.u32 %v679, 7
      %v681 = vsub.s32 0, %v680
      %v682 = vrot.slane %v678, %v681
      %v683 = vmul.f32 %v646, %v682
      %v684 = vmul.f32 %v647, %v682
      %v685 = vmul.f32 %v648, %v682
      %v686 = vmul.f32 %v649, %v682
      %v687 = vmul.f32 %v650, %v682
      %v688 = vmul.f32 %v651, %v682
      %v689 = vmul.f32 %v652, %v682
      %v690 = vmul.f32 %v653, %v682
      %v691 = vmul.f32 %v654, %v682
      %v692 = vmul.f32 %v655, %v682
      %v693 = vmul.f32 %v656, %v682
      %v694 = vmul.f32 %v657, %v682
      %v695 = vmul.f32 %v658, %v682
      %v696 = vmul.f32 %v659, %v682
      %v697 = vmul.f32 %v660, %v682
      %v698 = vmul.f32 %v661, %v682
      %v699 = vmul.f32 %v662, %v682
      %v700 = vmul.f32 %v663, %v682
      %v701 = vmul.f32 %v664, %v682
      %v702 = vmul.f32 %v665, %v682
      %v703 = vmul.f32 %v666, %v682
      %v704 = vmul.f32 %v667, %v682
      %v705 = vmul.f32 %v668, %v682
      %v706 = vmul.f32 %v669, %v682
      %v707 = vmul.f32 %v670, %v682
      %v708 = vmul.f32 %v671, %v682
      %v709 = vmul.f32 %v672, %v682
      %v710 = vmul.f32 %v673, %v682
      %v711 = vmul.f32 %v674, %v682
      %v712 = vmul.f32 %v675, %v682
      %v713 = vmul.f32 %v676, %v682
      %v714 = vmul.f32 %v677, %v682
      %v715 = vadd.f32 %v613, %v683
      %v716 = vadd.f32 %v614, %v684
      %v717 = vadd.f32 %v615, %v685
      %v718 = vadd.f32 %v616, %v686
      %v719 = vadd.f32 %v617, %v687
      %v720 = vadd.f32 %v618, %v688
      %v721 = vadd.f32 %v619, %v689
      %v722 = vadd.f32 %v620, %v690
      %v723 = vadd.f32 %v621, %v691
      %v724 = vadd.f32 %v622, %v692
      %v725 = vadd.f32 %v623, %v693
      %v726 = vadd.f32 %v624, %v694
      %v727 = vadd.f32 %v625, %v695
      %v728 = vadd.f32 %v626, %v696
      %v729 = vadd.f32 %v627, %v697
      %v730 = vadd.f32 %v628, %v698
      %v731 = vadd.f32 %v629, %v699
      %v732 = vadd.f32 %v630, %v700
      %v733 = vadd.f32 %v631, %v701
      %v734 = vadd.f32 %v632, %v702
      %v735 = vadd.f32 %v633, %v703
      %v736 = vadd.f32 %v634, %v704
      %v737 = vadd.f32 %v635, %v705
      %v738 = vadd.f32 %v636, %v706
      %v739 = vadd.f32 %v637, %v707
      %v740 = vadd.f32 %v638, %v708
      %v741 = vadd.f32 %v639, %v709
      %v742 = vadd.f32 %v640, %v710
      %v743 = vadd.f32 %v641, %v711
      %v744 = vadd.f32 %v642, %v712
      %v745 = vadd.f32 %v643, %v713
      %v746 = vadd.f32 %v644, %v714
      %v747 = vld [vmem:[%s645 + $0x1] sm:$0xff]
      %v748 = vld [vmem:[%s645 + $0x9] sm:$0xff]
      %v749 = vld [vmem:[%s645 + $0x19] sm:$0xff]
      %v750 = vld [vmem:[%s645 + $0x21] sm:$0xff]
      %v751 = vld [vmem:[%s645 + $0x31] sm:$0xff]
      %v752 = vld [vmem:[%s645 + $0x39] sm:$0xff]
      %v753 = vld [vmem:[%s645 + $0x49] sm:$0xff]
      %v754 = vld [vmem:[%s645 + $0x51] sm:$0xff]
      %v755 = vld [vmem:[%s645 + $0x61] sm:$0xff]
      %v756 = vld [vmem:[%s645 + $0x69] sm:$0xff]
      %v757 = vld [vmem:[%s645 + $0x79] sm:$0xff]
      %v758 = vld [vmem:[%s645 + $0x81] sm:$0xff]
      %v759 = vld [vmem:[%s645 + $0x91] sm:$0xff]
      %v760 = vld [vmem:[%s645 + $0x99] sm:$0xff]
      %v761 = vld [vmem:[%s645 + $0xa9] sm:$0xff]
      %v762 = vld [vmem:[%s645 + $0xb1] sm:$0xff]
      %v763 = vld [vmem:[%s645 + $0xc1] sm:$0xff]
      %v764 = vld [vmem:[%s645 + $0xc9] sm:$0xff]
      %v765 = vld [vmem:[%s645 + $0xd9] sm:$0xff]
      %v766 = vld [vmem:[%s645 + $0xe1] sm:$0xff]
      %v767 = vld [vmem:[%s645 + $0xf1] sm:$0xff]
      %v768 = vld [vmem:[%s645 + $0xf9] sm:$0xff]
      %v769 = vld [vmem:[%s645 + $0x109] sm:$0xff]
      %v770 = vld [vmem:[%s645 + $0x111] sm:$0xff]
      %v771 = vld [vmem:[%s645 + $0x121] sm:$0xff]
      %v772 = vld [vmem:[%s645 + $0x129] sm:$0xff]
      %v773 = vld [vmem:[%s645 + $0x139] sm:$0xff]
      %v774 = vld [vmem:[%s645 + $0x141] sm:$0xff]
      %v775 = vld [vmem:[%s645 + $0x151] sm:$0xff]
      %v776 = vld [vmem:[%s645 + $0x159] sm:$0xff]
      %v777 = vld [vmem:[%s645 + $0x169] sm:$0xff]
      %v778 = vld [vmem:[%s645 + $0x171] sm:$0xff]
      %v779 = vld [vmem:[%s1 + $0x4] sm:$0x1]
      %v780 = vlaneseq
      %v781 = vshrl.u32 %v780, 7
      %v782 = vsub.s32 0, %v781
      %v783 = vrot.slane %v779, %v782
      %v784 = vmul.f32 %v747, %v783
      %v785 = vmul.f32 %v748, %v783
      %v786 = vmul.f32 %v749, %v783
      %v787 = vmul.f32 %v750, %v783
      %v788 = vmul.f32 %v751, %v783
      %v789 = vmul.f32 %v752, %v783
      %v790 = vmul.f32 %v753, %v783
      %v791 = vmul.f32 %v754, %v783
      %v792 = vmul.f32 %v755, %v783
      %v793 = vmul.f32 %v756, %v783
      %v794 = vmul.f32 %v757, %v783
      %v795 = vmul.f32 %v758, %v783
      %v796 = vmul.f32 %v759, %v783
      %v797 = vmul.f32 %v760, %v783
      %v798 = vmul.f32 %v761, %v783
      %v799 = vmul.f32 %v762, %v783
      %v800 = vmul.f32 %v763, %v783
      %v801 = vmul.f32 %v764, %v783
      %v802 = vmul.f32 %v765, %v783
      %v803 = vmul.f32 %v766, %v783
      %v804 = vmul.f32 %v767, %v783
      %v805 = vmul.f32 %v768, %v783
      %v806 = vmul.f32 %v769, %v783
      %v807 = vmul.f32 %v770, %v783
      %v808 = vmul.f32 %v771, %v783
      %v809 = vmul.f32 %v772, %v783
      %v810 = vmul.f32 %v773, %v783
      %v811 = vmul.f32 %v774, %v783
      %v812 = vmul.f32 %v775, %v783
      %v813 = vmul.f32 %v776, %v783
      %v814 = vmul.f32 %v777, %v783
      %v815 = vmul.f32 %v778, %v783
      %v816 = vadd.f32 %v715, %v784
      %v817 = vadd.f32 %v716, %v785
      %v818 = vadd.f32 %v717, %v786
      %v819 = vadd.f32 %v718, %v787
      %v820 = vadd.f32 %v719, %v788
      %v821 = vadd.f32 %v720, %v789
      %v822 = vadd.f32 %v721, %v790
      %v823 = vadd.f32 %v722, %v791
      %v824 = vadd.f32 %v723, %v792
      %v825 = vadd.f32 %v724, %v793
      %v826 = vadd.f32 %v725, %v794
      %v827 = vadd.f32 %v726, %v795
      %v828 = vadd.f32 %v727, %v796
      %v829 = vadd.f32 %v728, %v797
      %v830 = vadd.f32 %v729, %v798
      %v831 = vadd.f32 %v730, %v799
      %v832 = vadd.f32 %v731, %v800
      %v833 = vadd.f32 %v732, %v801
      %v834 = vadd.f32 %v733, %v802
      %v835 = vadd.f32 %v734, %v803
      %v836 = vadd.f32 %v735, %v804
      %v837 = vadd.f32 %v736, %v805
      %v838 = vadd.f32 %v737, %v806
      %v839 = vadd.f32 %v738, %v807
      %v840 = vadd.f32 %v739, %v808
      %v841 = vadd.f32 %v740, %v809
      %v842 = vadd.f32 %v741, %v810
      %v843 = vadd.f32 %v742, %v811
      %v844 = vadd.f32 %v743, %v812
      %v845 = vadd.f32 %v744, %v813
      %v846 = vadd.f32 %v745, %v814
      %v847 = vadd.f32 %v746, %v815
      %v848 = vld [vmem:[%s645 + $0x2] sm:$0xff]
      %v849 = vld [vmem:[%s645 + $0xa] sm:$0xff]
      %v850 = vld [vmem:[%s645 + $0x1a] sm:$0xff]
      %v851 = vld [vmem:[%s645 + $0x22] sm:$0xff]
      %v852 = vld [vmem:[%s645 + $0x32] sm:$0xff]
      %v853 = vld [vmem:[%s645 + $0x3a] sm:$0xff]
      %v854 = vld [vmem:[%s645 + $0x4a] sm:$0xff]
      %v855 = vld [vmem:[%s645 + $0x52] sm:$0xff]
      %v856 = vld [vmem:[%s645 + $0x62] sm:$0xff]
      %v857 = vld [vmem:[%s645 + $0x6a] sm:$0xff]
      %v858 = vld [vmem:[%s645 + $0x7a] sm:$0xff]
      %v859 = vld [vmem:[%s645 + $0x82] sm:$0xff]
      %v860 = vld [vmem:[%s645 + $0x92] sm:$0xff]
      %v861 = vld [vmem:[%s645 + $0x9a] sm:$0xff]
      %v862 = vld [vmem:[%s645 + $0xaa] sm:$0xff]
      %v863 = vld [vmem:[%s645 + $0xb2] sm:$0xff]
      %v864 = vld [vmem:[%s645 + $0xc2] sm:$0xff]
      %v865 = vld [vmem:[%s645 + $0xca] sm:$0xff]
      %v866 = vld [vmem:[%s645 + $0xda] sm:$0xff]
      %v867 = vld [vmem:[%s645 + $0xe2] sm:$0xff]
      %v868 = vld [vmem:[%s645 + $0xf2] sm:$0xff]
      %v869 = vld [vmem:[%s645 + $0xfa] sm:$0xff]
      %v870 = vld [vmem:[%s645 + $0x10a] sm:$0xff]
      %v871 = vld [vmem:[%s645 + $0x112] sm:$0xff]
      %v872 = vld [vmem:[%s645 + $0x122] sm:$0xff]
      %v873 = vld [vmem:[%s645 + $0x12a] sm:$0xff]
      %v874 = vld [vmem:[%s645 + $0x13a] sm:$0xff]
      %v875 = vld [vmem:[%s645 + $0x142] sm:$0xff]
      %v876 = vld [vmem:[%s645 + $0x152] sm:$0xff]
      %v877 = vld [vmem:[%s645 + $0x15a] sm:$0xff]
      %v878 = vld [vmem:[%s645 + $0x16a] sm:$0xff]
      %v879 = vld [vmem:[%s645 + $0x172] sm:$0xff]
      %v880 = vld [vmem:[%s1 + $0x5] sm:$0x1]
      %v881 = vlaneseq
      %v882 = vshrl.u32 %v881, 7
      %v883 = vsub.s32 0, %v882
      %v884 = vrot.slane %v880, %v883
      %v885 = vmul.f32 %v848, %v884
      %v886 = vmul.f32 %v849, %v884
      %v887 = vmul.f32 %v850, %v884
      %v888 = vmul.f32 %v851, %v884
      %v889 = vmul.f32 %v852, %v884
      %v890 = vmul.f32 %v853, %v884
      %v891 = vmul.f32 %v854, %v884
      %v892 = vmul.f32 %v855, %v884
      %v893 = vmul.f32 %v856, %v884
      %v894 = vmul.f32 %v857, %v884
      %v895 = vmul.f32 %v858, %v884
      %v896 = vmul.f32 %v859, %v884
      %v897 = vmul.f32 %v860, %v884
      %v898 = vmul.f32 %v861, %v884
      %v899 = vmul.f32 %v862, %v884
      %v900 = vmul.f32 %v863, %v884
      %v901 = vmul.f32 %v864, %v884
      %v902 = vmul.f32 %v865, %v884
      %v903 = vmul.f32 %v866, %v884
      %v904 = vmul.f32 %v867, %v884
      %v905 = vmul.f32 %v868, %v884
      %v906 = vmul.f32 %v869, %v884
      %v907 = vmul.f32 %v870, %v884
      %v908 = vmul.f32 %v871, %v884
      %v909 = vmul.f32 %v872, %v884
      %v910 = vmul.f32 %v873, %v884
      %v911 = vmul.f32 %v874, %v884
      %v912 = vmul.f32 %v875, %v884
      %v913 = vmul.f32 %v876, %v884
      %v914 = vmul.f32 %v877, %v884
      %v915 = vmul.f32 %v878, %v884
      %v916 = vmul.f32 %v879, %v884
      %v917 = vadd.f32 %v816, %v885
      %v918 = vadd.f32 %v817, %v886
      %v919 = vadd.f32 %v818, %v887
      %v920 = vadd.f32 %v819, %v888
      %v921 = vadd.f32 %v820, %v889
      %v922 = vadd.f32 %v821, %v890
      %v923 = vadd.f32 %v822, %v891
      %v924 = vadd.f32 %v823, %v892
      %v925 = vadd.f32 %v824, %v893
      %v926 = vadd.f32 %v825, %v894
      %v927 = vadd.f32 %v826, %v895
      %v928 = vadd.f32 %v827, %v896
      %v929 = vadd.f32 %v828, %v897
      %v930 = vadd.f32 %v829, %v898
      %v931 = vadd.f32 %v830, %v899
      %v932 = vadd.f32 %v831, %v900
      %v933 = vadd.f32 %v832, %v901
      %v934 = vadd.f32 %v833, %v902
      %v935 = vadd.f32 %v834, %v903
      %v936 = vadd.f32 %v835, %v904
      %v937 = vadd.f32 %v836, %v905
      %v938 = vadd.f32 %v837, %v906
      %v939 = vadd.f32 %v838, %v907
      %v940 = vadd.f32 %v839, %v908
      %v941 = vadd.f32 %v840, %v909
      %v942 = vadd.f32 %v841, %v910
      %v943 = vadd.f32 %v842, %v911
      %v944 = vadd.f32 %v843, %v912
      %v945 = vadd.f32 %v844, %v913
      %v946 = vadd.f32 %v845, %v914
      %v947 = vadd.f32 %v846, %v915
      %v948 = vadd.f32 %v847, %v916
      %s949 = scalar_lea.vmem [#allocation2], 48
      %v950 = vld [vmem:[%s949] sm:$0xff]
      %v951 = vld [vmem:[%s949 + $0x8] sm:$0xff]
      %v952 = vld [vmem:[%s949 + $0x18] sm:$0xff]
      %v953 = vld [vmem:[%s949 + $0x20] sm:$0xff]
      %v954 = vld [vmem:[%s949 + $0x30] sm:$0xff]
      %v955 = vld [vmem:[%s949 + $0x38] sm:$0xff]
      %v956 = vld [vmem:[%s949 + $0x48] sm:$0xff]
      %v957 = vld [vmem:[%s949 + $0x50] sm:$0xff]
      %v958 = vld [vmem:[%s949 + $0x60] sm:$0xff]
      %v959 = vld [vmem:[%s949 + $0x68] sm:$0xff]
      %v960 = vld [vmem:[%s949 + $0x78] sm:$0xff]
      %v961 = vld [vmem:[%s949 + $0x80] sm:$0xff]
      %v962 = vld [vmem:[%s949 + $0x90] sm:$0xff]
      %v963 = vld [vmem:[%s949 + $0x98] sm:$0xff]
      %v964 = vld [vmem:[%s949 + $0xa8] sm:$0xff]
      %v965 = vld [vmem:[%s949 + $0xb0] sm:$0xff]
      %v966 = vld [vmem:[%s949 + $0xc0] sm:$0xff]
      %v967 = vld [vmem:[%s949 + $0xc8] sm:$0xff]
      %v968 = vld [vmem:[%s949 + $0xd8] sm:$0xff]
      %v969 = vld [vmem:[%s949 + $0xe0] sm:$0xff]
      %v970 = vld [vmem:[%s949 + $0xf0] sm:$0xff]
      %v971 = vld [vmem:[%s949 + $0xf8] sm:$0xff]
      %v972 = vld [vmem:[%s949 + $0x108] sm:$0xff]
      %v973 = vld [vmem:[%s949 + $0x110] sm:$0xff]
      %v974 = vld [vmem:[%s949 + $0x120] sm:$0xff]
      %v975 = vld [vmem:[%s949 + $0x128] sm:$0xff]
      %v976 = vld [vmem:[%s949 + $0x138] sm:$0xff]
      %v977 = vld [vmem:[%s949 + $0x140] sm:$0xff]
      %v978 = vld [vmem:[%s949 + $0x150] sm:$0xff]
      %v979 = vld [vmem:[%s949 + $0x158] sm:$0xff]
      %v980 = vld [vmem:[%s949 + $0x168] sm:$0xff]
      %v981 = vld [vmem:[%s949 + $0x170] sm:$0xff]
      %v982 = vld [vmem:[%s1 + $0x6] sm:$0x1]
      %v983 = vlaneseq
      %v984 = vshrl.u32 %v983, 7
      %v985 = vsub.s32 0, %v984
      %v986 = vrot.slane %v982, %v985
      %v987 = vmul.f32 %v950, %v986
      %v988 = vmul.f32 %v951, %v986
      %v989 = vmul.f32 %v952, %v986
      %v990 = vmul.f32 %v953, %v986
      %v991 = vmul.f32 %v954, %v986
      %v992 = vmul.f32 %v955, %v986
      %v993 = vmul.f32 %v956, %v986
      %v994 = vmul.f32 %v957, %v986
      %v995 = vmul.f32 %v958, %v986
      %v996 = vmul.f32 %v959, %v986
      %v997 = vmul.f32 %v960, %v986
      %v998 = vmul.f32 %v961, %v986
      %v999 = vmul.f32 %v962, %v986
      %v1000 = vmul.f32 %v963, %v986
      %v1001 = vmul.f32 %v964, %v986
      %v1002 = vmul.f32 %v965, %v986
      %v1003 = vmul.f32 %v966, %v986
      %v1004 = vmul.f32 %v967, %v986
      %v1005 = vmul.f32 %v968, %v986
      %v1006 = vmul.f32 %v969, %v986
      %v1007 = vmul.f32 %v970, %v986
      %v1008 = vmul.f32 %v971, %v986
      %v1009 = vmul.f32 %v972, %v986
      %v1010 = vmul.f32 %v973, %v986
      %v1011 = vmul.f32 %v974, %v986
      %v1012 = vmul.f32 %v975, %v986
      %v1013 = vmul.f32 %v976, %v986
      %v1014 = vmul.f32 %v977, %v986
      %v1015 = vmul.f32 %v978, %v986
      %v1016 = vmul.f32 %v979, %v986
      %v1017 = vmul.f32 %v980, %v986
      %v1018 = vmul.f32 %v981, %v986
      %v1019 = vadd.f32 %v917, %v987
      %v1020 = vadd.f32 %v918, %v988
      %v1021 = vadd.f32 %v919, %v989
      %v1022 = vadd.f32 %v920, %v990
      %v1023 = vadd.f32 %v921, %v991
      %v1024 = vadd.f32 %v922, %v992
      %v1025 = vadd.f32 %v923, %v993
      %v1026 = vadd.f32 %v924, %v994
      %v1027 = vadd.f32 %v925, %v995
      %v1028 = vadd.f32 %v926, %v996
      %v1029 = vadd.f32 %v927, %v997
      %v1030 = vadd.f32 %v928, %v998
      %v1031 = vadd.f32 %v929, %v999
      %v1032 = vadd.f32 %v930, %v1000
      %v1033 = vadd.f32 %v931, %v1001
      %v1034 = vadd.f32 %v932, %v1002
      %v1035 = vadd.f32 %v933, %v1003
      %v1036 = vadd.f32 %v934, %v1004
      %v1037 = vadd.f32 %v935, %v1005
      %v1038 = vadd.f32 %v936, %v1006
      %v1039 = vadd.f32 %v937, %v1007
      %v1040 = vadd.f32 %v938, %v1008
      %v1041 = vadd.f32 %v939, %v1009
      %v1042 = vadd.f32 %v940, %v1010
      %v1043 = vadd.f32 %v941, %v1011
      %v1044 = vadd.f32 %v942, %v1012
      %v1045 = vadd.f32 %v943, %v1013
      %v1046 = vadd.f32 %v944, %v1014
      %v1047 = vadd.f32 %v945, %v1015
      %v1048 = vadd.f32 %v946, %v1016
      %v1049 = vadd.f32 %v947, %v1017
      %v1050 = vadd.f32 %v948, %v1018
      %v1051 = vld [vmem:[%s949 + $0x1] sm:$0xff]
      %v1052 = vld [vmem:[%s949 + $0x9] sm:$0xff]
      %v1053 = vld [vmem:[%s949 + $0x19] sm:$0xff]
      %v1054 = vld [vmem:[%s949 + $0x21] sm:$0xff]
      %v1055 = vld [vmem:[%s949 + $0x31] sm:$0xff]
      %v1056 = vld [vmem:[%s949 + $0x39] sm:$0xff]
      %v1057 = vld [vmem:[%s949 + $0x49] sm:$0xff]
      %v1058 = vld [vmem:[%s949 + $0x51] sm:$0xff]
      %v1059 = vld [vmem:[%s949 + $0x61] sm:$0xff]
      %v1060 = vld [vmem:[%s949 + $0x69] sm:$0xff]
      %v1061 = vld [vmem:[%s949 + $0x79] sm:$0xff]
      %v1062 = vld [vmem:[%s949 + $0x81] sm:$0xff]
      %v1063 = vld [vmem:[%s949 + $0x91] sm:$0xff]
      %v1064 = vld [vmem:[%s949 + $0x99] sm:$0xff]
      %v1065 = vld [vmem:[%s949 + $0xa9] sm:$0xff]
      %v1066 = vld [vmem:[%s949 + $0xb1] sm:$0xff]
      %v1067 = vld [vmem:[%s949 + $0xc1] sm:$0xff]
      %v1068 = vld [vmem:[%s949 + $0xc9] sm:$0xff]
      %v1069 = vld [vmem:[%s949 + $0xd9] sm:$0xff]
      %v1070 = vld [vmem:[%s949 + $0xe1] sm:$0xff]
      %v1071 = vld [vmem:[%s949 + $0xf1] sm:$0xff]
      %v1072 = vld [vmem:[%s949 + $0xf9] sm:$0xff]
      %v1073 = vld [vmem:[%s949 + $0x109] sm:$0xff]
      %v1074 = vld [vmem:[%s949 + $0x111] sm:$0xff]
      %v1075 = vld [vmem:[%s949 + $0x121] sm:$0xff]
      %v1076 = vld [vmem:[%s949 + $0x129] sm:$0xff]
      %v1077 = vld [vmem:[%s949 + $0x139] sm:$0xff]
      %v1078 = vld [vmem:[%s949 + $0x141] sm:$0xff]
      %v1079 = vld [vmem:[%s949 + $0x151] sm:$0xff]
      %v1080 = vld [vmem:[%s949 + $0x159] sm:$0xff]
      %v1081 = vld [vmem:[%s949 + $0x169] sm:$0xff]
      %v1082 = vld [vmem:[%s949 + $0x171] sm:$0xff]
      %v1083 = vld [vmem:[%s1 + $0x7] sm:$0x1]
      %v1084 = vlaneseq
      %v1085 = vshrl.u32 %v1084, 7
      %v1086 = vsub.s32 0, %v1085
      %v1087 = vrot.slane %v1083, %v1086
      %v1088 = vmul.f32 %v1051, %v1087
      %v1089 = vmul.f32 %v1052, %v1087
      %v1090 = vmul.f32 %v1053, %v1087
      %v1091 = vmul.f32 %v1054, %v1087
      %v1092 = vmul.f32 %v1055, %v1087
      %v1093 = vmul.f32 %v1056, %v1087
      %v1094 = vmul.f32 %v1057, %v1087
      %v1095 = vmul.f32 %v1058, %v1087
      %v1096 = vmul.f32 %v1059, %v1087
      %v1097 = vmul.f32 %v1060, %v1087
      %v1098 = vmul.f32 %v1061, %v1087
      %v1099 = vmul.f32 %v1062, %v1087
      %v1100 = vmul.f32 %v1063, %v1087
      %v1101 = vmul.f32 %v1064, %v1087
      %v1102 = vmul.f32 %v1065, %v1087
      %v1103 = vmul.f32 %v1066, %v1087
      %v1104 = vmul.f32 %v1067, %v1087
      %v1105 = vmul.f32 %v1068, %v1087
      %v1106 = vmul.f32 %v1069, %v1087
      %v1107 = vmul.f32 %v1070, %v1087
      %v1108 = vmul.f32 %v1071, %v1087
      %v1109 = vmul.f32 %v1072, %v1087
      %v1110 = vmul.f32 %v1073, %v1087
      %v1111 = vmul.f32 %v1074, %v1087
      %v1112 = vmul.f32 %v1075, %v1087
      %v1113 = vmul.f32 %v1076, %v1087
      %v1114 = vmul.f32 %v1077, %v1087
      %v1115 = vmul.f32 %v1078, %v1087
      %v1116 = vmul.f32 %v1079, %v1087
      %v1117 = vmul.f32 %v1080, %v1087
      %v1118 = vmul.f32 %v1081, %v1087
      %v1119 = vmul.f32 %v1082, %v1087
      %v1120 = vadd.f32 %v1019, %v1088
      %v1121 = vadd.f32 %v1020, %v1089
      %v1122 = vadd.f32 %v1021, %v1090
      %v1123 = vadd.f32 %v1022, %v1091
      %v1124 = vadd.f32 %v1023, %v1092
      %v1125 = vadd.f32 %v1024, %v1093
      %v1126 = vadd.f32 %v1025, %v1094
      %v1127 = vadd.f32 %v1026, %v1095
      %v1128 = vadd.f32 %v1027, %v1096
      %v1129 = vadd.f32 %v1028, %v1097
      %v1130 = vadd.f32 %v1029, %v1098
      %v1131 = vadd.f32 %v1030, %v1099
      %v1132 = vadd.f32 %v1031, %v1100
      %v1133 = vadd.f32 %v1032, %v1101
      %v1134 = vadd.f32 %v1033, %v1102
      %v1135 = vadd.f32 %v1034, %v1103
      %v1136 = vadd.f32 %v1035, %v1104
      %v1137 = vadd.f32 %v1036, %v1105
      %v1138 = vadd.f32 %v1037, %v1106
      %v1139 = vadd.f32 %v1038, %v1107
      %v1140 = vadd.f32 %v1039, %v1108
      %v1141 = vadd.f32 %v1040, %v1109
      %v1142 = vadd.f32 %v1041, %v1110
      %v1143 = vadd.f32 %v1042, %v1111
      %v1144 = vadd.f32 %v1043, %v1112
      %v1145 = vadd.f32 %v1044, %v1113
      %v1146 = vadd.f32 %v1045, %v1114
      %v1147 = vadd.f32 %v1046, %v1115
      %v1148 = vadd.f32 %v1047, %v1116
      %v1149 = vadd.f32 %v1048, %v1117
      %v1150 = vadd.f32 %v1049, %v1118
      %v1151 = vadd.f32 %v1050, %v1119
      %v1152 = vld [vmem:[%s949 + $0x2] sm:$0xff]
      %v1153 = vld [vmem:[%s949 + $0xa] sm:$0xff]
      %v1154 = vld [vmem:[%s949 + $0x1a] sm:$0xff]
      %v1155 = vld [vmem:[%s949 + $0x22] sm:$0xff]
      %v1156 = vld [vmem:[%s949 + $0x32] sm:$0xff]
      %v1157 = vld [vmem:[%s949 + $0x3a] sm:$0xff]
      %v1158 = vld [vmem:[%s949 + $0x4a] sm:$0xff]
      %v1159 = vld [vmem:[%s949 + $0x52] sm:$0xff]
      %v1160 = vld [vmem:[%s949 + $0x62] sm:$0xff]
      %v1161 = vld [vmem:[%s949 + $0x6a] sm:$0xff]
      %v1162 = vld [vmem:[%s949 + $0x7a] sm:$0xff]
      %v1163 = vld [vmem:[%s949 + $0x82] sm:$0xff]
      %v1164 = vld [vmem:[%s949 + $0x92] sm:$0xff]
      %v1165 = vld [vmem:[%s949 + $0x9a] sm:$0xff]
      %v1166 = vld [vmem:[%s949 + $0xaa] sm:$0xff]
      %v1167 = vld [vmem:[%s949 + $0xb2] sm:$0xff]
      %v1168 = vld [vmem:[%s949 + $0xc2] sm:$0xff]
      %v1169 = vld [vmem:[%s949 + $0xca] sm:$0xff]
      %v1170 = vld [vmem:[%s949 + $0xda] sm:$0xff]
      %v1171 = vld [vmem:[%s949 + $0xe2] sm:$0xff]
      %v1172 = vld [vmem:[%s949 + $0xf2] sm:$0xff]
      %v1173 = vld [vmem:[%s949 + $0xfa] sm:$0xff]
      %v1174 = vld [vmem:[%s949 + $0x10a] sm:$0xff]
      %v1175 = vld [vmem:[%s949 + $0x112] sm:$0xff]
      %v1176 = vld [vmem:[%s949 + $0x122] sm:$0xff]
      %v1177 = vld [vmem:[%s949 + $0x12a] sm:$0xff]
      %v1178 = vld [vmem:[%s949 + $0x13a] sm:$0xff]
      %v1179 = vld [vmem:[%s949 + $0x142] sm:$0xff]
      %v1180 = vld [vmem:[%s949 + $0x152] sm:$0xff]
      %v1181 = vld [vmem:[%s949 + $0x15a] sm:$0xff]
      %v1182 = vld [vmem:[%s949 + $0x16a] sm:$0xff]
      %v1183 = vld [vmem:[%s949 + $0x172] sm:$0xff]
      %v1184 = vld [vmem:[%s1 + $0x8] sm:$0x1]
      %v1185 = vlaneseq
      %v1186 = vshrl.u32 %v1185, 7
      %v1187 = vsub.s32 0, %v1186
      %v1188 = vrot.slane %v1184, %v1187
      %v1189 = vmul.f32 %v1152, %v1188
      %v1190 = vmul.f32 %v1153, %v1188
      %v1191 = vmul.f32 %v1154, %v1188
      %v1192 = vmul.f32 %v1155, %v1188
      %v1193 = vmul.f32 %v1156, %v1188
      %v1194 = vmul.f32 %v1157, %v1188
      %v1195 = vmul.f32 %v1158, %v1188
      %v1196 = vmul.f32 %v1159, %v1188
      %v1197 = vmul.f32 %v1160, %v1188
      %v1198 = vmul.f32 %v1161, %v1188
      %v1199 = vmul.f32 %v1162, %v1188
      %v1200 = vmul.f32 %v1163, %v1188
      %v1201 = vmul.f32 %v1164, %v1188
      %v1202 = vmul.f32 %v1165, %v1188
      %v1203 = vmul.f32 %v1166, %v1188
      %v1204 = vmul.f32 %v1167, %v1188
      %v1205 = vmul.f32 %v1168, %v1188
      %v1206 = vmul.f32 %v1169, %v1188
      %v1207 = vmul.f32 %v1170, %v1188
      %v1208 = vmul.f32 %v1171, %v1188
      %v1209 = vmul.f32 %v1172, %v1188
      %v1210 = vmul.f32 %v1173, %v1188
      %v1211 = vmul.f32 %v1174, %v1188
      %v1212 = vmul.f32 %v1175, %v1188
      %v1213 = vmul.f32 %v1176, %v1188
      %v1214 = vmul.f32 %v1177, %v1188
      %v1215 = vmul.f32 %v1178, %v1188
      %v1216 = vmul.f32 %v1179, %v1188
      %v1217 = vmul.f32 %v1180, %v1188
      %v1218 = vmul.f32 %v1181, %v1188
      %v1219 = vmul.f32 %v1182, %v1188
      %v1220 = vmul.f32 %v1183, %v1188
      %v1221 = vadd.f32 %v1120, %v1189
      %v1222 = vadd.f32 %v1121, %v1190
      %v1223 = vadd.f32 %v1122, %v1191
      %v1224 = vadd.f32 %v1123, %v1192
      %v1225 = vadd.f32 %v1124, %v1193
      %v1226 = vadd.f32 %v1125, %v1194
      %v1227 = vadd.f32 %v1126, %v1195
      %v1228 = vadd.f32 %v1127, %v1196
      %v1229 = vadd.f32 %v1128, %v1197
      %v1230 = vadd.f32 %v1129, %v1198
      %v1231 = vadd.f32 %v1130, %v1199
      %v1232 = vadd.f32 %v1131, %v1200
      %v1233 = vadd.f32 %v1132, %v1201
      %v1234 = vadd.f32 %v1133, %v1202
      %v1235 = vadd.f32 %v1134, %v1203
      %v1236 = vadd.f32 %v1135, %v1204
      %v1237 = vadd.f32 %v1136, %v1205
      %v1238 = vadd.f32 %v1137, %v1206
      %v1239 = vadd.f32 %v1138, %v1207
      %v1240 = vadd.f32 %v1139, %v1208
      %v1241 = vadd.f32 %v1140, %v1209
      %v1242 = vadd.f32 %v1141, %v1210
      %v1243 = vadd.f32 %v1142, %v1211
      %v1244 = vadd.f32 %v1143, %v1212
      %v1245 = vadd.f32 %v1144, %v1213
      %v1246 = vadd.f32 %v1145, %v1214
      %v1247 = vadd.f32 %v1146, %v1215
      %v1248 = vadd.f32 %v1147, %v1216
      %v1249 = vadd.f32 %v1148, %v1217
      %v1250 = vadd.f32 %v1149, %v1218
      %v1251 = vadd.f32 %v1150, %v1219
      %v1252 = vadd.f32 %v1151, %v1220
      %v1253 = vld [vmem:[%s2] sm:$0xf]
      %v1255 = vsel %vm318, %v1221, 0
      %v1258 = vsel %vm318, %v1222, 0
      %v1261 = vsel %vm318, %v1223, 0
      %v1264 = vsel %vm318, %v1224, 0
      %v1267 = vsel %vm318, %v1225, 0
      %v1270 = vsel %vm318, %v1226, 0
      %v1273 = vsel %vm318, %v1227, 0
      %v1276 = vsel %vm318, %v1228, 0
      %v1279 = vsel %vm318, %v1229, 0
      %v1282 = vsel %vm318, %v1230, 0
      %v1285 = vsel %vm318, %v1231, 0
      %v1288 = vsel %vm318, %v1232, 0
      %v1291 = vsel %vm318, %v1233, 0
      %v1294 = vsel %vm318, %v1234, 0
      %v1297 = vsel %vm318, %v1235, 0
      %v1300 = vsel %vm318, %v1236, 0
      %v1303 = vsel %vm318, %v1237, 0
      %v1306 = vsel %vm318, %v1238, 0
      %v1309 = vsel %vm318, %v1239, 0
      %v1312 = vsel %vm318, %v1240, 0
      %v1315 = vsel %vm318, %v1241, 0
      %v1318 = vsel %vm318, %v1242, 0
      %v1321 = vsel %vm318, %v1243, 0
      %v1324 = vsel %vm318, %v1244, 0
      %v1327 = vsel %vm318, %v1245, 0
      %v1330 = vsel %vm318, %v1246, 0
      %v1333 = vsel %vm318, %v1247, 0
      %v1336 = vsel %vm318, %v1248, 0
      %v1339 = vsel %vm318, %v1249, 0
      %v1342 = vsel %vm318, %v1250, 0
      %v1345 = vsel %vm318, %v1251, 0
      %v1348 = vsel %vm318, %v1252, 0
      %vm1350 = vcmask 1043456
      %v1352 = vsel %vm1350, %v1253, 0
      %1354 = vmatprep.subr.mxu0 0.0
      %1355 = vmatpush1.msra.mxu0 %v1352
      %1356 = vmatprep.subr.mxu0 0.0
      %1357 = vmatpush1.msra.mxu0 0.0
      %1358 = vmatprep.subr.mxu0 0.0
      %1359 = vmatpush1.msra.mxu0 0.0
      %1360 = vmatprep.subr.mxu0 0.0
      %1361 = vmatpush1.msra.mxu0 0.0
      %1362 = vmatprep.subr.mxu0 0.0
      %1363 = vmatpush1.msra.mxu0 0.0
      %1364 = vmatprep.subr.mxu0 0.0
      %1365 = vmatpush1.msra.mxu0 0.0
      %1366 = vmatprep.subr.mxu0 0.0
      %1367 = vmatpush1.msra.mxu0 0.0
      %1368 = vmatprep.subr.mxu0 0.0
      %1369 = vmatpush1.msra.mxu0 0.0
      %1370 = vmatprep.subr.mxu0 0.0
      %1371 = vmatpush1.msra.mxu0 0.0
      %1372 = vmatprep.subr.mxu0 0.0
      %1373 = vmatpush1.msra.mxu0 0.0
      %1374 = vmatprep.subr.mxu0 0.0
      %1375 = vmatpush1.msra.mxu0 0.0
      %1376 = vmatprep.subr.mxu0 0.0
      %1377 = vmatpush1.msra.mxu0 0.0
      %1378 = vmatprep.subr.mxu0 0.0
      %1379 = vmatpush1.msra.mxu0 0.0
      %1380 = vmatprep.subr.mxu0 0.0
      %1381 = vmatpush1.msra.mxu0 0.0
      %1382 = vmatprep.subr.mxu0 0.0
      %1383 = vmatpush1.msra.mxu0 0.0
      %1384 = vmatprep.subr.mxu0 0.0
      %1385 = vmatpush1.msra.mxu0 0.0
      %1386 = vmatprep.subr.mxu0 0.0
      %1387 = vmatpush1.msra.mxu0 0.0
      %1388 = vmatprep.subr.mxu0 0.0
      %1389 = vmatpush1.msra.mxu0 0.0
      %1390 = vmatprep.subr.mxu0 0.0
      %1391 = vmatpush1.msra.mxu0 0.0
      %1392 = vmatprep.subr.mxu0 0.0
      %1393 = vmatpush1.msra.mxu0 0.0
      %1394 = vmatprep.subr.mxu0 0.0
      %1395 = vmatpush1.msra.mxu0 0.0
      %1396 = vmatprep.subr.mxu0 0.0
      %1397 = vmatpush1.msra.mxu0 0.0
      %1398 = vmatprep.subr.mxu0 0.0
      %1399 = vmatpush1.msra.mxu0 0.0
      %1400 = vmatprep.subr.mxu0 0.0
      %1401 = vmatpush1.msra.mxu0 0.0
      %1402 = vmatprep.subr.mxu0 0.0
      %1403 = vmatpush1.msra.mxu0 0.0
      %1404 = vmatprep.subr.mxu0 0.0
      %1405 = vmatpush1.msra.mxu0 0.0
      %1406 = vmatprep.subr.mxu0 0.0
      %1407 = vmatpush1.msra.mxu0 0.0
      %1408 = vmatprep.subr.mxu0 0.0
      %1409 = vmatpush1.msra.mxu0 0.0
      %1410 = vmatprep.subr.mxu0 0.0
      %1411 = vmatpush1.msra.mxu0 0.0
      %1412 = vmatprep.subr.mxu0 0.0
      %1413 = vmatpush1.msra.mxu0 0.0
      %1414 = vmatprep.subr.mxu0 0.0
      %1415 = vmatpush1.msra.mxu0 0.0
      %1416 = vmatprep.subr.mxu0 0.0
      %1417 = vmatpush1.msra.mxu0 0.0
      %1418 = vmatprep.mubr.f32.mxu0 0.0
      %1419 = vmatmul.mubr.f32.gmra.mrb[0].mxu0 %v1255
      %v1420 = vpop.f32.mrb[0].mxu0
      %v1421 = vadd.f32 0.0, %v1420
      %v1422 = vpop.f32.mrb[0].mxu0
      %1423 = vmatprep.mubr.f32.mxu0 0.0
      %1424 = vmatmul.mubr.f32.gmra.mrb[0].mxu0 %v1258
      %v1425 = vpop.f32.mrb[0].mxu0
      %v1426 = vadd.f32 0.0, %v1425
      %v1427 = vpop.f32.mrb[0].mxu0
      %1428 = vmatprep.mubr.f32.mxu0 0.0
      %1429 = vmatmul.mubr.f32.gmra.mrb[0].mxu0 %v1261
      %v1430 = vpop.f32.mrb[0].mxu0
      %v1431 = vadd.f32 0.0, %v1430
      %v1432 = vpop.f32.mrb[0].mxu0
      %1433 = vmatprep.mubr.f32.mxu0 0.0
      %1434 = vmatmul.mubr.f32.gmra.mrb[0].mxu0 %v1264
      %v1435 = vpop.f32.mrb[0].mxu0
      %v1436 = vadd.f32 0.0, %v1435
      %v1437 = vpop.f32.mrb[0].mxu0
      %1438 = vmatprep.mubr.f32.mxu0 0.0
      %1439 = vmatmul.mubr.f32.gmra.mrb[0].mxu0 %v1267
      %v1440 = vpop.f32.mrb[0].mxu0
      %v1441 = vadd.f32 0.0, %v1440
      %v1442 = vpop.f32.mrb[0].mxu0
      %1443 = vmatprep.mubr.f32.mxu0 0.0
      %1444 = vmatmul.mubr.f32.gmra.mrb[0].mxu0 %v1270
      %v1445 = vpop.f32.mrb[0].mxu0
      %v1446 = vadd.f32 0.0, %v1445
      %v1447 = vpop.f32.mrb[0].mxu0
      %1448 = vmatprep.mubr.f32.mxu0 0.0
      %1449 = vmatmul.mubr.f32.gmra.mrb[0].mxu0 %v1273
      %v1450 = vpop.f32.mrb[0].mxu0
      %v1451 = vadd.f32 0.0, %v1450
      %v1452 = vpop.f32.mrb[0].mxu0
      %1453 = vmatprep.mubr.f32.mxu0 0.0
      %1454 = vmatmul.mubr.f32.gmra.mrb[0].mxu0 %v1276
      %v1455 = vpop.f32.mrb[0].mxu0
      %v1456 = vadd.f32 0.0, %v1455
      %v1457 = vpop.f32.mrb[0].mxu0
      %1458 = vmatprep.mubr.f32.mxu0 0.0
      %1459 = vmatmul.mubr.f32.gmra.mrb[0].mxu0 %v1279
      %v1460 = vpop.f32.mrb[0].mxu0
      %v1461 = vadd.f32 0.0, %v1460
      %v1462 = vpop.f32.mrb[0].mxu0
      %1463 = vmatprep.mubr.f32.mxu0 0.0
      %1464 = vmatmul.mubr.f32.gmra.mrb[0].mxu0 %v1282
      %v1465 = vpop.f32.mrb[0].mxu0
      %v1466 = vadd.f32 0.0, %v1465
      %v1467 = vpop.f32.mrb[0].mxu0
      %1468 = vmatprep.mubr.f32.mxu0 0.0
      %1469 = vmatmul.mubr.f32.gmra.mrb[0].mxu0 %v1285
      %v1470 = vpop.f32.mrb[0].mxu0
      %v1471 = vadd.f32 0.0, %v1470
      %v1472 = vpop.f32.mrb[0].mxu0
      %1473 = vmatprep.mubr.f32.mxu0 0.0
      %1474 = vmatmul.mubr.f32.gmra.mrb[0].mxu0 %v1288
      %v1475 = vpop.f32.mrb[0].mxu0
      %v1476 = vadd.f32 0.0, %v1475
      %v1477 = vpop.f32.mrb[0].mxu0
      %1478 = vmatprep.mubr.f32.mxu0 0.0
      %1479 = vmatmul.mubr.f32.gmra.mrb[0].mxu0 %v1291
      %v1480 = vpop.f32.mrb[0].mxu0
      %v1481 = vadd.f32 0.0, %v1480
      %v1482 = vpop.f32.mrb[0].mxu0
      %1483 = vmatprep.mubr.f32.mxu0 0.0
      %1484 = vmatmul.mubr.f32.gmra.mrb[0].mxu0 %v1294
      %v1485 = vpop.f32.mrb[0].mxu0
      %v1486 = vadd.f32 0.0, %v1485
      %v1487 = vpop.f32.mrb[0].mxu0
      %1488 = vmatprep.mubr.f32.mxu0 0.0
      %1489 = vmatmul.mubr.f32.gmra.mrb[0].mxu0 %v1297
      %v1490 = vpop.f32.mrb[0].mxu0
      %v1491 = vadd.f32 0.0, %v1490
      %v1492 = vpop.f32.mrb[0].mxu0
      %1493 = vmatprep.mubr.f32.mxu0 0.0
      %1494 = vmatmul.mubr.f32.gmra.mrb[0].mxu0 %v1300
      %v1495 = vpop.f32.mrb[0].mxu0
      %v1496 = vadd.f32 0.0, %v1495
      %v1497 = vpop.f32.mrb[0].mxu0
      %1498 = vmatprep.mubr.f32.mxu0 0.0
      %1499 = vmatmul.mubr.f32.gmra.mrb[0].mxu0 %v1303
      %v1500 = vpop.f32.mrb[0].mxu0
      %v1501 = vadd.f32 0.0, %v1500
      %v1502 = vpop.f32.mrb[0].mxu0
      %1503 = vmatprep.mubr.f32.mxu0 0.0
      %1504 = vmatmul.mubr.f32.gmra.mrb[0].mxu0 %v1306
      %v1505 = vpop.f32.mrb[0].mxu0
      %v1506 = vadd.f32 0.0, %v1505
      %v1507 = vpop.f32.mrb[0].mxu0
      %1508 = vmatprep.mubr.f32.mxu0 0.0
      %1509 = vmatmul.mubr.f32.gmra.mrb[0].mxu0 %v1309
      %v1510 = vpop.f32.mrb[0].mxu0
      %v1511 = vadd.f32 0.0, %v1510
      %v1512 = vpop.f32.mrb[0].mxu0
      %1513 = vmatprep.mubr.f32.mxu0 0.0
      %1514 = vmatmul.mubr.f32.gmra.mrb[0].mxu0 %v1312
      %v1515 = vpop.f32.mrb[0].mxu0
      %v1516 = vadd.f32 0.0, %v1515
      %v1517 = vpop.f32.mrb[0].mxu0
      %1518 = vmatprep.mubr.f32.mxu0 0.0
      %1519 = vmatmul.mubr.f32.gmra.mrb[0].mxu0 %v1315
      %v1520 = vpop.f32.mrb[0].mxu0
      %v1521 = vadd.f32 0.0, %v1520
      %v1522 = vpop.f32.mrb[0].mxu0
      %1523 = vmatprep.mubr.f32.mxu0 0.0
      %1524 = vmatmul.mubr.f32.gmra.mrb[0].mxu0 %v1318
      %v1525 = vpop.f32.mrb[0].mxu0
      %v1526 = vadd.f32 0.0, %v1525
      %v1527 = vpop.f32.mrb[0].mxu0
      %1528 = vmatprep.mubr.f32.mxu0 0.0
      %1529 = vmatmul.mubr.f32.gmra.mrb[0].mxu0 %v1321
      %v1530 = vpop.f32.mrb[0].mxu0
      %v1531 = vadd.f32 0.0, %v1530
      %v1532 = vpop.f32.mrb[0].mxu0
      %1533 = vmatprep.mubr.f32.mxu0 0.0
      %1534 = vmatmul.mubr.f32.gmra.mrb[0].mxu0 %v1324
      %v1535 = vpop.f32.mrb[0].mxu0
      %v1536 = vadd.f32 0.0, %v1535
      %v1537 = vpop.f32.mrb[0].mxu0
      %1538 = vmatprep.mubr.f32.mxu0 0.0
      %1539 = vmatmul.mubr.f32.gmra.mrb[0].mxu0 %v1327
      %v1540 = vpop.f32.mrb[0].mxu0
      %v1541 = vadd.f32 0.0, %v1540
      %v1542 = vpop.f32.mrb[0].mxu0
      %1543 = vmatprep.mubr.f32.mxu0 0.0
      %1544 = vmatmul.mubr.f32.gmra.mrb[0].mxu0 %v1330
      %v1545 = vpop.f32.mrb[0].mxu0
      %v1546 = vadd.f32 0.0, %v1545
      %v1547 = vpop.f32.mrb[0].mxu0
      %1548 = vmatprep.mubr.f32.mxu0 0.0
      %1549 = vmatmul.mubr.f32.gmra.mrb[0].mxu0 %v1333
      %v1550 = vpop.f32.mrb[0].mxu0
      %v1551 = vadd.f32 0.0, %v1550
      %v1552 = vpop.f32.mrb[0].mxu0
      %1553 = vmatprep.mubr.f32.mxu0 0.0
      %1554 = vmatmul.mubr.f32.gmra.mrb[0].mxu0 %v1336
      %v1555 = vpop.f32.mrb[0].mxu0
      %v1556 = vadd.f32 0.0, %v1555
      %v1557 = vpop.f32.mrb[0].mxu0
      %1558 = vmatprep.mubr.f32.mxu0 0.0
      %1559 = vmatmul.mubr.f32.gmra.mrb[0].mxu0 %v1339
      %v1560 = vpop.f32.mrb[0].mxu0
      %v1561 = vadd.f32 0.0, %v1560
      %v1562 = vpop.f32.mrb[0].mxu0
      %1563 = vmatprep.mubr.f32.mxu0 0.0
      %1564 = vmatmul.mubr.f32.gmra.mrb[0].mxu0 %v1342
      %v1565 = vpop.f32.mrb[0].mxu0
      %v1566 = vadd.f32 0.0, %v1565
      %v1567 = vpop.f32.mrb[0].mxu0
      %1568 = vmatprep.mubr.f32.mxu0 0.0
      %1569 = vmatmul.mubr.f32.gmra.mrb[0].mxu0 %v1345
      %v1570 = vpop.f32.mrb[0].mxu0
      %v1571 = vadd.f32 0.0, %v1570
      %v1572 = vpop.f32.mrb[0].mxu0
      %1573 = vmatprep.mubr.f32.mxu0 0.0
      %1574 = vmatmul.mubr.f32.gmra.mrb[0].mxu0 %v1348
      %v1575 = vpop.f32.mrb[0].mxu0
      %v1576 = vadd.f32 0.0, %v1575
      %v1577 = vpop.f32.mrb[0].mxu0
      %1578 = vdwg.mxu0
      %vm1579 = vcmask 64512
      %1580 = vst.msk [vmem:[%s204] sm:$0xff] %vm1579, %v1421
      %1581 = vst.msk [vmem:[%s204 + $0x8] sm:$0xff] %vm1579, %v1426
      %1582 = vst.msk [vmem:[%s204 + $0x10] sm:$0xff] %vm1579, %v1431
      %1583 = vst.msk [vmem:[%s204 + $0x18] sm:$0xff] %vm1579, %v1436
      %1584 = vst.msk [vmem:[%s204 + $0x20] sm:$0xff] %vm1579, %v1441
      %1585 = vst.msk [vmem:[%s204 + $0x28] sm:$0xff] %vm1579, %v1446
      %1586 = vst.msk [vmem:[%s204 + $0x30] sm:$0xff] %vm1579, %v1451
      %1587 = vst.msk [vmem:[%s204 + $0x38] sm:$0xff] %vm1579, %v1456
      %1588 = vst.msk [vmem:[%s204 + $0x40] sm:$0xff] %vm1579, %v1461
      %1589 = vst.msk [vmem:[%s204 + $0x48] sm:$0xff] %vm1579, %v1466
      %1590 = vst.msk [vmem:[%s204 + $0x50] sm:$0xff] %vm1579, %v1471
      %1591 = vst.msk [vmem:[%s204 + $0x58] sm:$0xff] %vm1579, %v1476
      %1592 = vst.msk [vmem:[%s204 + $0x60] sm:$0xff] %vm1579, %v1481
      %1593 = vst.msk [vmem:[%s204 + $0x68] sm:$0xff] %vm1579, %v1486
      %1594 = vst.msk [vmem:[%s204 + $0x70] sm:$0xff] %vm1579, %v1491
      %1595 = vst.msk [vmem:[%s204 + $0x78] sm:$0xff] %vm1579, %v1496
      %1596 = vst.msk [vmem:[%s204 + $0x80] sm:$0xff] %vm1579, %v1501
      %1597 = vst.msk [vmem:[%s204 + $0x88] sm:$0xff] %vm1579, %v1506
      %1598 = vst.msk [vmem:[%s204 + $0x90] sm:$0xff] %vm1579, %v1511
      %1599 = vst.msk [vmem:[%s204 + $0x98] sm:$0xff] %vm1579, %v1516
      %1600 = vst.msk [vmem:[%s204 + $0xa0] sm:$0xff] %vm1579, %v1521
      %1601 = vst.msk [vmem:[%s204 + $0xa8] sm:$0xff] %vm1579, %v1526
      %1602 = vst.msk [vmem:[%s204 + $0xb0] sm:$0xff] %vm1579, %v1531
      %1603 = vst.msk [vmem:[%s204 + $0xb8] sm:$0xff] %vm1579, %v1536
      %1604 = vst.msk [vmem:[%s204 + $0xc0] sm:$0xff] %vm1579, %v1541
      %1605 = vst.msk [vmem:[%s204 + $0xc8] sm:$0xff] %vm1579, %v1546
      %1606 = vst.msk [vmem:[%s204 + $0xd0] sm:$0xff] %vm1579, %v1551
      %1607 = vst.msk [vmem:[%s204 + $0xd8] sm:$0xff] %vm1579, %v1556
      %1608 = vst.msk [vmem:[%s204 + $0xe0] sm:$0xff] %vm1579, %v1561
      %1609 = vst.msk [vmem:[%s204 + $0xe8] sm:$0xff] %vm1579, %v1566
      %1610 = vst.msk [vmem:[%s204 + $0xf0] sm:$0xff] %vm1579, %v1571
      %1611 = vst.msk [vmem:[%s204 + $0xf8] sm:$0xff] %vm1579, %v1576
      %v1612 = vsel %vm1579, %v1421, 0.0
      %v1613 = vsel %vm1579, %v1426, 0.0
      %v1614 = vadd.f32 %v1612, %v1613
      %v1615 = vsel %vm1579, %v1431, 0.0
      %v1616 = vadd.f32 %v1614, %v1615
      %v1617 = vsel %vm1579, %v1436, 0.0
      %v1618 = vadd.f32 %v1616, %v1617
      %v1619 = vsel %vm1579, %v1441, 0.0
      %v1620 = vadd.f32 %v1618, %v1619
      %v1621 = vsel %vm1579, %v1446, 0.0
      %v1622 = vadd.f32 %v1620, %v1621
      %v1623 = vsel %vm1579, %v1451, 0.0
      %v1624 = vadd.f32 %v1622, %v1623
      %v1625 = vsel %vm1579, %v1456, 0.0
      %v1626 = vadd.f32 %v1624, %v1625
      %v1627 = vsel %vm1579, %v1461, 0.0
      %v1628 = vadd.f32 %v1626, %v1627
      %v1629 = vsel %vm1579, %v1466, 0.0
      %v1630 = vadd.f32 %v1628, %v1629
      %v1631 = vsel %vm1579, %v1471, 0.0
      %v1632 = vadd.f32 %v1630, %v1631
      %v1633 = vsel %vm1579, %v1476, 0.0
      %v1634 = vadd.f32 %v1632, %v1633
      %v1635 = vsel %vm1579, %v1481, 0.0
      %v1636 = vadd.f32 %v1634, %v1635
      %v1637 = vsel %vm1579, %v1486, 0.0
      %v1638 = vadd.f32 %v1636, %v1637
      %v1639 = vsel %vm1579, %v1491, 0.0
      %v1640 = vadd.f32 %v1638, %v1639
      %v1641 = vsel %vm1579, %v1496, 0.0
      %v1642 = vadd.f32 %v1640, %v1641
      %v1643 = vsel %vm1579, %v1501, 0.0
      %v1644 = vadd.f32 %v1642, %v1643
      %v1645 = vsel %vm1579, %v1506, 0.0
      %v1646 = vadd.f32 %v1644, %v1645
      %v1647 = vsel %vm1579, %v1511, 0.0
      %v1648 = vadd.f32 %v1646, %v1647
      %v1649 = vsel %vm1579, %v1516, 0.0
      %v1650 = vadd.f32 %v1648, %v1649
      %v1651 = vsel %vm1579, %v1521, 0.0
      %v1652 = vadd.f32 %v1650, %v1651
      %v1653 = vsel %vm1579, %v1526, 0.0
      %v1654 = vadd.f32 %v1652, %v1653
      %v1655 = vsel %vm1579, %v1531, 0.0
      %v1656 = vadd.f32 %v1654, %v1655
      %v1657 = vsel %vm1579, %v1536, 0.0
      %v1658 = vadd.f32 %v1656, %v1657
      %v1659 = vsel %vm1579, %v1541, 0.0
      %v1660 = vadd.f32 %v1658, %v1659
      %v1661 = vsel %vm1579, %v1546, 0.0
      %v1662 = vadd.f32 %v1660, %v1661
      %v1663 = vsel %vm1579, %v1551, 0.0
      %v1664 = vadd.f32 %v1662, %v1663
      %v1665 = vsel %vm1579, %v1556, 0.0
      %v1666 = vadd.f32 %v1664, %v1665
      %v1667 = vsel %vm1579, %v1561, 0.0
      %v1668 = vadd.f32 %v1666, %v1667
      %v1669 = vsel %vm1579, %v1566, 0.0
      %v1670 = vadd.f32 %v1668, %v1669
      %v1671 = vsel %vm1579, %v1571, 0.0
      %v1672 = vadd.f32 %v1670, %v1671
      %v1673 = vsel %vm1579, %v1576, 0.0
      %v1674 = vadd.f32 %v1672, %v1673
      %v1675 = vrot.slane %v1674, 4
      %v1676 = vadd.f32 %v1674, %v1675
      %v1677 = vrot.slane %v1676, 2
      %v1678 = vadd.f32 %v1676, %v1677
      %v1679 = vrot.slane %v1678, 1
      %v1680 = vadd.f32 %v1678, %v1679
      %v1681 = vmul.f32 %v1421, %v1421
      %v1682 = vmul.f32 %v1426, %v1426
      %v1683 = vmul.f32 %v1431, %v1431
      %v1684 = vmul.f32 %v1436, %v1436
      %v1685 = vmul.f32 %v1441, %v1441
      %v1686 = vmul.f32 %v1446, %v1446
      %v1687 = vmul.f32 %v1451, %v1451
      %v1688 = vmul.f32 %v1456, %v1456
      %v1689 = vmul.f32 %v1461, %v1461
      %v1690 = vmul.f32 %v1466, %v1466
      %v1691 = vmul.f32 %v1471, %v1471
      %v1692 = vmul.f32 %v1476, %v1476
      %v1693 = vmul.f32 %v1481, %v1481
      %v1694 = vmul.f32 %v1486, %v1486
      %v1695 = vmul.f32 %v1491, %v1491
      %v1696 = vmul.f32 %v1496, %v1496
      %v1697 = vmul.f32 %v1501, %v1501
      %v1698 = vmul.f32 %v1506, %v1506
      %v1699 = vmul.f32 %v1511, %v1511
      %v1700 = vmul.f32 %v1516, %v1516
      %v1701 = vmul.f32 %v1521, %v1521
      %v1702 = vmul.f32 %v1526, %v1526
      %v1703 = vmul.f32 %v1531, %v1531
      %v1704 = vmul.f32 %v1536, %v1536
      %v1705 = vmul.f32 %v1541, %v1541
      %v1706 = vmul.f32 %v1546, %v1546
      %v1707 = vmul.f32 %v1551, %v1551
      %v1708 = vmul.f32 %v1556, %v1556
      %v1709 = vmul.f32 %v1561, %v1561
      %v1710 = vmul.f32 %v1566, %v1566
      %v1711 = vmul.f32 %v1571, %v1571
      %v1712 = vmul.f32 %v1576, %v1576
      %v1713 = vsel %vm1579, %v1681, 0.0
      %v1714 = vsel %vm1579, %v1682, 0.0
      %v1715 = vadd.f32 %v1713, %v1714
      %v1716 = vsel %vm1579, %v1683, 0.0
      %v1717 = vadd.f32 %v1715, %v1716
      %v1718 = vsel %vm1579, %v1684, 0.0
      %v1719 = vadd.f32 %v1717, %v1718
      %v1720 = vsel %vm1579, %v1685, 0.0
      %v1721 = vadd.f32 %v1719, %v1720
      %v1722 = vsel %vm1579, %v1686, 0.0
      %v1723 = vadd.f32 %v1721, %v1722
      %v1724 = vsel %vm1579, %v1687, 0.0
      %v1725 = vadd.f32 %v1723, %v1724
      %v1726 = vsel %vm1579, %v1688, 0.0
      %v1727 = vadd.f32 %v1725, %v1726
      %v1728 = vsel %vm1579, %v1689, 0.0
      %v1729 = vadd.f32 %v1727, %v1728
      %v1730 = vsel %vm1579, %v1690, 0.0
      %v1731 = vadd.f32 %v1729, %v1730
      %v1732 = vsel %vm1579, %v1691, 0.0
      %v1733 = vadd.f32 %v1731, %v1732
      %v1734 = vsel %vm1579, %v1692, 0.0
      %v1735 = vadd.f32 %v1733, %v1734
      %v1736 = vsel %vm1579, %v1693, 0.0
      %v1737 = vadd.f32 %v1735, %v1736
      %v1738 = vsel %vm1579, %v1694, 0.0
      %v1739 = vadd.f32 %v1737, %v1738
      %v1740 = vsel %vm1579, %v1695, 0.0
      %v1741 = vadd.f32 %v1739, %v1740
      %v1742 = vsel %vm1579, %v1696, 0.0
      %v1743 = vadd.f32 %v1741, %v1742
      %v1744 = vsel %vm1579, %v1697, 0.0
      %v1745 = vadd.f32 %v1743, %v1744
      %v1746 = vsel %vm1579, %v1698, 0.0
      %v1747 = vadd.f32 %v1745, %v1746
      %v1748 = vsel %vm1579, %v1699, 0.0
      %v1749 = vadd.f32 %v1747, %v1748
      %v1750 = vsel %vm1579, %v1700, 0.0
      %v1751 = vadd.f32 %v1749, %v1750
      %v1752 = vsel %vm1579, %v1701, 0.0
      %v1753 = vadd.f32 %v1751, %v1752
      %v1754 = vsel %vm1579, %v1702, 0.0
      %v1755 = vadd.f32 %v1753, %v1754
      %v1756 = vsel %vm1579, %v1703, 0.0
      %v1757 = vadd.f32 %v1755, %v1756
      %v1758 = vsel %vm1579, %v1704, 0.0
      %v1759 = vadd.f32 %v1757, %v1758
      %v1760 = vsel %vm1579, %v1705, 0.0
      %v1761 = vadd.f32 %v1759, %v1760
      %v1762 = vsel %vm1579, %v1706, 0.0
      %v1763 = vadd.f32 %v1761, %v1762
      %v1764 = vsel %vm1579, %v1707, 0.0
      %v1765 = vadd.f32 %v1763, %v1764
      %v1766 = vsel %vm1579, %v1708, 0.0
      %v1767 = vadd.f32 %v1765, %v1766
      %v1768 = vsel %vm1579, %v1709, 0.0
      %v1769 = vadd.f32 %v1767, %v1768
      %v1770 = vsel %vm1579, %v1710, 0.0
      %v1771 = vadd.f32 %v1769, %v1770
      %v1772 = vsel %vm1579, %v1711, 0.0
      %v1773 = vadd.f32 %v1771, %v1772
      %v1774 = vsel %vm1579, %v1712, 0.0
      %v1775 = vadd.f32 %v1773, %v1774
      %v1776 = vrot.slane %v1775, 4
      %v1777 = vadd.f32 %v1775, %v1776
      %v1778 = vrot.slane %v1777, 2
      %v1779 = vadd.f32 %v1777, %v1778
      %v1780 = vrot.slane %v1779, 1
      %v1781 = vadd.f32 %v1779, %v1780
      %vm1782 = vcmask 1040384
      %v1783 = vsel %vm1782, %v1680, %v1781
      %vm1784 = vcmask 58368
      %1785 = vst.msk [vmem:[%s209] sm:$0x3] %vm1784, %v1783
      %s1786 = smul.u32 32, %s16
      %p1787 = scmp.lt.s32.totalorder %s1786, 63
      %s1788 = scalar_select %p1787, %s1786, 63
      %s1789 = smul.addr %s1788, 8
      %s1790 = scalar_lea.vmem %s3, %s1789
      %p1791 = scmp.lt.s32.totalorder %s16, 1
      %s1792 = scalar_select %p1791, %s16, 1
      %s1793 = smul.addr %s1792, 2
      %s1794 = scalar_lea.vmem %s4, %s1793
      // Predicated region
      $region33: #{sep_conv_forward.2} parent=31 // pred_check
        %p1795 = pneg %p102
      $region34: #{sep_conv_forward.2} parent=31 // pred_check_branch
        %1797 = sbr.rel (%p1795) target = $region36
      $region35: #{sep_conv_forward.2} parent=31 // pred_region
        %s1798 = smul.u32 32, %s16
      $region36: #{sep_conv_forward.2} parent=31 // pred_fallthru
        _
      // Predicated region
      $region37: #{sep_conv_forward.2} parent=31 // pred_check
        %p1799 = pneg %p128
      $region38: #{sep_conv_forward.2} parent=31 // pred_check_branch
        %1801 = sbr.rel (%p1799) target = $region40
      $region39: #{sep_conv_forward.2} parent=31 // pred_region
        _
      $region40: #{sep_conv_forward.2} parent=31 // pred_fallthru
        _
    $region32: #{sep_conv_forward.2} parent=5 // pred_fallthru
      _
    %p1802 = scmp.le.s32.totalorder 2, %s11
    // Predicated region
    $region41: #{sep_conv_forward.2} parent=5 // pred_check
      %p1803 = pneg %p1802
    $region42: #{sep_conv_forward.2} parent=5 // pred_check_branch
      %1805 = sbr.rel (%p1803) target = $region44
    $region43: #{sep_conv_forward.2} parent=5 // pred_region
      %s1806 = ssub.s32 %s11, 2
      // Predicated region
      $region45: #{sep_conv_forward.2} parent=43 // pred_check
        %p1807 = pneg %p108
      $region46: #{sep_conv_forward.2} parent=43 // pred_check_branch
        %1809 = sbr.rel (%p1807) target = $region48
      $region47: #{sep_conv_forward.2} parent=43 // pred_region
        %s1810 = smul.u32 32, %s17
        %p1811 = scmp.lt.s32.totalorder %s1810, 63
        %s1812 = scalar_select %p1811, %s1810, 63
        %s1813 = smul.addr %s1812, 8
        %s1814 = scalar_lea.vmem %s3, %s1813
      $region48: #{sep_conv_forward.2} parent=43 // pred_fallthru
        _
      // Predicated region
      $region49: #{sep_conv_forward.2} parent=43 // pred_check
        %p1815 = pneg %p134
      $region50: #{sep_conv_forward.2} parent=43 // pred_check_branch
        %1817 = sbr.rel (%p1815) target = $region52
      $region51: #{sep_conv_forward.2} parent=43 // pred_region
        %p1818 = scmp.lt.s32.totalorder %s17, 1
        %s1819 = scalar_select %p1818, %s17, 1
        %s1820 = smul.addr %s1819, 2
        %s1821 = scalar_lea.vmem %s4, %s1820
      $region52: #{sep_conv_forward.2} parent=43 // pred_fallthru
        _
    $region44: #{sep_conv_forward.2} parent=5 // pred_fallthru
      _
  $region6: #{sep_conv_forward.2} parent=0 // loop_footer
    %s15 = sadd.s32 1, %s11
  $region7: #{sep_conv_forward.2} parent=0 // loop_footer_branch
    %10 = sbr.rel target = $region3
  $region8: #{sep_conv_forward.2} parent=0 // loop_exit
    _

</llo_original>
